<compile_context>
chip_gen: v5e
topology: v5e:2x2
jax: 0.10.0
libtpu: 0.0.40
codegen_flags: <defaults>
</compile_context>

<pallas_src>
import math
from functools import partial

import jax
import jax.numpy as jnp
from jax.experimental import pallas as pl
from jax.experimental.pallas import tpu as pltpu


def _round_up(x, m):
    return (x + m - 1) // m * m


# ----------------------------- Pallas kernel ------------------------------ #
def _stft_sums_kernel(xf_ref, yf_ref, basis_ref, out_ref, *,
                      n_frames, n_freq, frame_tile):
    """One grid step = (batch element, frame tile).

    xf_ref, yf_ref :: (1, frame_tile, n_fft)  VMEM bf16  (overlapping frames)
    basis_ref      :: (n_fft, 2*Fp)           VMEM bf16  ([cos | -sin], window folded in)
    out_ref        :: (1, 1, 1, 128)          VMEM f32   lanes 0..2 = partial sums:
        lane 0: sum (y_mag - x_mag)^2    (spectral-convergence numerator)
        lane 1: sum  y_mag^2             (spectral-convergence denominator)
        lane 2: sum |log y_mag - log x_mag|
    """
    ft = pl.program_id(1)
    fp = basis_ref.shape[-1] // 2

    basis = basis_ref[...]
    # Windowed one-sided DFT: one lane-dense MXU matmul per signal (real | imag fused in N).
    xs = jnp.dot(xf_ref[0], basis, preferred_element_type=jnp.float32)   # (Ft, 2*Fp) f32
    ys = jnp.dot(yf_ref[0], basis, preferred_element_type=jnp.float32)

    x_sq = xs[:, :fp] * xs[:, :fp] + xs[:, fp:] * xs[:, fp:]             # |X|^2 (Ft, Fp)
    y_sq = ys[:, :fp] * ys[:, :fp] + ys[:, fp:] * ys[:, fp:]

    # Mask zero-padded frames (rows) and zero-padded frequency lanes (cols).
    row = jax.lax.broadcasted_iota(jnp.int32, (frame_tile, fp), 0) + ft * frame_tile
    col = jax.lax.broadcasted_iota(jnp.int32, (frame_tile, fp), 1)
    valid = (row < n_frames) & (col < n_freq)

    x_mag = jnp.sqrt(x_sq)
    y_mag = jnp.sqrt(y_sq)
    diff = y_mag - x_mag

    # |log y_mag - log x_mag| == 0.5 * |log(y_sq / x_sq)|  (single log per element).
    # Padded positions use 1/1 -> log = 0.  (No clamp: matches the PyTorch reference,
    # which also takes log of the raw magnitudes.)
    safe_x = jnp.where(valid, x_sq, 1.0)
    safe_y = jnp.where(valid, y_sq, 1.0)
    log_term = 0.5 * jnp.abs(jnp.log(safe_y / safe_x))

    s_diff = jnp.sum(jnp.where(valid, diff * diff, 0.0), keepdims=True)  # (1, 1)
    s_den = jnp.sum(jnp.where(valid, y_sq, 0.0), keepdims=True)
    s_log = jnp.sum(log_term, keepdims=True)

    lane = jax.lax.broadcasted_iota(jnp.int32, (1, 128), 1)
    out_ref[0, 0] = (s_diff * (lane == 0).astype(jnp.float32)
                     + s_den * (lane == 1).astype(jnp.float32)
                     + s_log * (lane == 2).astype(jnp.float32))


def _stft_loss_sums(x_frames, y_frames, basis, *, n_frames, n_freq, frame_tile):
    B, n_frames_pad, n_fft = x_frames.shape
    n_ft = n_frames_pad // frame_tile
    two_fp = basis.shape[1]

    kernel = partial(_stft_sums_kernel, n_frames=n_frames, n_freq=n_freq,
                     frame_tile=frame_tile)
    partials = pl.pallas_call(
        kernel,
        out_shape=jax.ShapeDtypeStruct((B, n_ft, 1, 128), jnp.float32),
        grid_spec=pltpu.PrefetchScalarGridSpec(
            num_scalar_prefetch=0,
            grid=(B, n_ft),
            in_specs=[
                pl.BlockSpec((1, frame_tile, n_fft), lambda b, ft: (b, ft, 0)),
                pl.BlockSpec((1, frame_tile, n_fft), lambda b, ft: (b, ft, 0)),
                pl.BlockSpec((n_fft, two_fp), lambda b, ft: (0, 0)),  # resident basis
            ],
            out_specs=pl.BlockSpec((1, 1, 1, 128), lambda b, ft: (b, ft, 0, 0)),
        ),
        compiler_params=pltpu.CompilerParams(
            dimension_semantics=("parallel", "parallel"),
            vmem_limit_bytes=48 * 1024 * 1024),
    )(x_frames, y_frames, basis)
    # Per-slice partials -> global sums (lanes 0..2).
    return jnp.sum(partials, axis=(0, 1, 2))


# ------------------------------- JAX glue ---------------------------------- #
def _hann_window(win_length):
    # torch.hann_window(win_length): periodic Hann.
    n = jnp.arange(win_length, dtype=jnp.float32)
    return 0.5 * (1.0 - jnp.cos(2.0 * math.pi * n / win_length))


def _make_basis(fft_size, win_length):
    """Fused, windowed, lane-padded one-sided DFT basis [cos | -sin] :: (n_fft, 2*Fp) bf16."""
    window = _hann_window(win_length)
    # torch.stft centers the window inside n_fft (zero pad both sides).
    left = (fft_size - win_length) // 2
    window_full = jnp.zeros((fft_size,), jnp.float32)
    window_full = window_full.at[left:left + win_length].set(window)

    n_freq = fft_size // 2 + 1
    fp = _round_up(n_freq, 128)
    n = jnp.arange(fft_size, dtype=jnp.float32)[:, None]           # (n_fft, 1)
    k = jnp.arange(n_freq, dtype=jnp.float32)[None, :]             # (1, Freq)
    ang = 2.0 * math.pi * n * k / fft_size
    cos_b = window_full[:, None] * jnp.cos(ang)
    sin_b = window_full[:, None] * (-jnp.sin(ang))
    pad = fp - n_freq
    cos_b = jnp.pad(cos_b, ((0, 0), (0, pad)))                     # zero freq-lane padding
    sin_b = jnp.pad(sin_b, ((0, 0), (0, pad)))
    basis = jnp.concatenate([cos_b, sin_b], axis=1)                # (n_fft, 2*Fp)
    return basis.astype(jnp.bfloat16), n_freq, fp


def _frame_signal(x, fft_size, hop_size, n_frames, n_frames_pad):
    """Reflect-pad (center=True) and extract overlapping frames, zero-padded to
    n_frames_pad along the frame axis.   x :: (B, T) -> (B, n_frames_pad, n_fft) bf16."""
    # TODO(synk): extract frames inside the kernel (pl.ds over the padded signal with the
    # static hop) to avoid the n_fft/hop HBM duplication; kept in JAX glue since this loss
    # is MXU-bound at realistic shapes and bf16 already halves the frame traffic.
    pad = fft_size // 2
    xp = jnp.pad(x, ((0, 0), (pad, pad)), mode="reflect")
    idx = (jnp.arange(n_frames)[:, None] * hop_size
           + jnp.arange(fft_size)[None, :])                        # (F, n_fft), in bounds
    frames = xp[:, idx]                                            # (B, F, n_fft)
    frames = jnp.pad(frames, ((0, 0), (0, n_frames_pad - n_frames), (0, 0)))
    return frames.astype(jnp.bfloat16)


def multi_resolution_stft_loss(x, y, fft_sizes, hop_sizes, win_lengths):
    """JAX/Pallas equivalent of _MultiResolutionSTFTLoss.forward.

    x, y :: (B, T) float32.  Returns (sc_loss, mag_loss) scalars.
    """
    assert len(fft_sizes) == len(hop_sizes) == len(win_lengths)
    B, T = x.shape
    sc_total = jnp.float32(0.0)
    mag_total = jnp.float32(0.0)
    for fs, hop, wl in zip(fft_sizes, hop_sizes, win_lengths):
        basis, n_freq, _ = _make_basis(fs, wl)
        n_frames = T // hop + 1                                    # torch.stft(center=True)
        frame_tile = min(256, _round_up(n_frames, 16))             # bf16 sublane-aligned
        n_frames_pad = _round_up(n_frames, frame_tile)
        xf = _frame_signal(x, fs, hop, n_frames, n_frames_pad)
        yf = _frame_signal(y, fs, hop, n_frames, n_frames_pad)
        sums = _stft_loss_sums(xf, yf, basis, n_frames=n_frames, n_freq=n_freq,
                               frame_tile=frame_tile)
        sc_total = sc_total + jnp.sqrt(sums[0]) / jnp.sqrt(sums[1])
        mag_total = mag_total + sums[2] / (B * n_frames * n_freq)
    n_res = len(fft_sizes)
    return sc_total / n_res, mag_total / n_res


# --------------------------------- main ------------------------------------ #
if __name__ == "__main__":
    key = jax.random.PRNGKey(0)
    kx, ky = jax.random.split(key)
    B, T = 2, 256
    x = jax.random.normal(kx, (B, T), dtype=jnp.float32)
    y = x + 0.1 * jax.random.normal(ky, (B, T), dtype=jnp.float32)

    fft_sizes = [64, 128]
    hop_sizes = [16, 32]
    win_lengths = [32, 64]

    loss_fn = jax.jit(partial(multi_resolution_stft_loss,
                              fft_sizes=fft_sizes,
                              hop_sizes=hop_sizes,
                              win_lengths=win_lengths))
    sc_loss, mag_loss = loss_fn(x, y)
    jax.block_until_ready((sc_loss, mag_loss))
    assert jnp.isfinite(sc_loss) and jnp.isfinite(mag_loss)
    print("KERNEL_OK")
</pallas_src>

<mosaic_0001>
module attributes {stable_mosaic.version = 11 : i64} {
  func.func @_stft_sums_kernel(%arg0: i32, %arg1: i32, %arg2: memref<1x16x128xbf16, #tpu.memory_space<vmem>>, %arg3: memref<1x16x128xbf16, #tpu.memory_space<vmem>>, %arg4: memref<128x256xbf16, #tpu.memory_space<vmem>>, %arg5: memref<1x1x1x128xf32, #tpu.memory_space<vmem>>) attributes {dimension_semantics = [#tpu.dimension_semantics<parallel>, #tpu.dimension_semantics<parallel>], iteration_bounds = array<i64: 2, 1>, scalar_prefetch = 0 : i64, scratch_operands = 0 : i64, tpu.core_type = #tpu.core_type<tc>, window_params = [{transform_indices = @transform_0, window_bounds = array<i64: 1, 16, 128>}, {transform_indices = @transform_1, window_bounds = array<i64: 1, 16, 128>}, {pipeline_mode = #tpu.pipeline_mode<synchronous>, transform_indices = @transform_2, window_bounds = array<i64: 128, 256>}, {transform_indices = @transform_3, window_bounds = array<i64: 1, 1, 1, 128>}]} {
    %c0 = arith.constant 0 : index
    %c0_0 = arith.constant 0 : index
    %0 = vector.load %arg4[%c0, %c0_0] : memref<128x256xbf16, #tpu.memory_space<vmem>>, vector<128x256xbf16>
    %c0_1 = arith.constant 0 : index
    %c0_2 = arith.constant 0 : index
    %c0_3 = arith.constant 0 : index
    %1 = vector.load %arg2[%c0_1, %c0_2, %c0_3] : memref<1x16x128xbf16, #tpu.memory_space<vmem>>, vector<1x16x128xbf16>
    %2 = vector.shape_cast %1 : vector<1x16x128xbf16> to vector<16x128xbf16>
    %cst = arith.constant dense<0.000000e+00> : vector<16x256xf32>
    %3 = tpu.matmul %2, %0, %cst {dimension_numbers = #tpu.dot_dimension_numbers<[1], [0], [0], [1], [0, 0, 1, 1], [], []>} : vector<16x128xbf16>, vector<128x256xbf16>, vector<16x256xf32> -> vector<16x256xf32>
    %c0_4 = arith.constant 0 : index
    %c0_5 = arith.constant 0 : index
    %c0_6 = arith.constant 0 : index
    %4 = vector.load %arg3[%c0_4, %c0_5, %c0_6] : memref<1x16x128xbf16, #tpu.memory_space<vmem>>, vector<1x16x128xbf16>
    %5 = vector.shape_cast %4 : vector<1x16x128xbf16> to vector<16x128xbf16>
    %cst_7 = arith.constant dense<0.000000e+00> : vector<16x256xf32>
    %6 = tpu.matmul %5, %0, %cst_7 {dimension_numbers = #tpu.dot_dimension_numbers<[1], [0], [0], [1], [0, 0, 1, 1], [], []>} : vector<16x128xbf16>, vector<128x256xbf16>, vector<16x256xf32> -> vector<16x256xf32>
    %7 = vector.extract_strided_slice %3 {offsets = [0, 0], sizes = [16, 128], strides = [1, 1]} : vector<16x256xf32> to vector<16x128xf32>
    %8 = vector.extract_strided_slice %3 {offsets = [0, 0], sizes = [16, 128], strides = [1, 1]} : vector<16x256xf32> to vector<16x128xf32>
    %9 = arith.mulf %7, %8 : vector<16x128xf32>
    %10 = vector.extract_strided_slice %3 {offsets = [0, 128], sizes = [16, 128], strides = [1, 1]} : vector<16x256xf32> to vector<16x128xf32>
    %11 = vector.extract_strided_slice %3 {offsets = [0, 128], sizes = [16, 128], strides = [1, 1]} : vector<16x256xf32> to vector<16x128xf32>
    %12 = arith.mulf %10, %11 : vector<16x128xf32>
    %13 = arith.addf %9, %12 : vector<16x128xf32>
    %14 = vector.extract_strided_slice %6 {offsets = [0, 0], sizes = [16, 128], strides = [1, 1]} : vector<16x256xf32> to vector<16x128xf32>
    %15 = vector.extract_strided_slice %6 {offsets = [0, 0], sizes = [16, 128], strides = [1, 1]} : vector<16x256xf32> to vector<16x128xf32>
    %16 = arith.mulf %14, %15 : vector<16x128xf32>
    %17 = vector.extract_strided_slice %6 {offsets = [0, 128], sizes = [16, 128], strides = [1, 1]} : vector<16x256xf32> to vector<16x128xf32>
    %18 = vector.extract_strided_slice %6 {offsets = [0, 128], sizes = [16, 128], strides = [1, 1]} : vector<16x256xf32> to vector<16x128xf32>
    %19 = arith.mulf %17, %18 : vector<16x128xf32>
    %20 = arith.addf %16, %19 : vector<16x128xf32>
    %21 = tpu.iota {dimensions = array<i32: 0>} : vector<16x128xi32>
    %c16_i32 = arith.constant 16 : i32
    %22 = arith.muli %arg1, %c16_i32 : i32
    %23 = vector.broadcast %22 : i32 to vector<16x128xi32>
    %24 = arith.addi %21, %23 : vector<16x128xi32>
    %25 = tpu.iota {dimensions = array<i32: 1>} : vector<16x128xi32>
    %c9_i32 = arith.constant 9 : i32
    %26 = vector.broadcast %c9_i32 : i32 to vector<16x128xi32>
    %27 = arith.cmpi slt, %24, %26 : vector<16x128xi32>
    %c65_i32 = arith.constant 65 : i32
    %28 = vector.broadcast %c65_i32 : i32 to vector<16x128xi32>
    %29 = arith.cmpi slt, %25, %28 : vector<16x128xi32>
    %30 = arith.andi %27, %29 : vector<16x128xi1>
    %31 = math.sqrt %13 : vector<16x128xf32>
    %32 = math.sqrt %20 : vector<16x128xf32>
    %33 = arith.subf %32, %31 : vector<16x128xf32>
    %cst_8 = arith.constant 1.000000e+00 : f32
    %34 = vector.broadcast %cst_8 : f32 to vector<16x128xf32>
    %35 = arith.select %30, %13, %34 : vector<16x128xi1>, vector<16x128xf32>
    %cst_9 = arith.constant 1.000000e+00 : f32
    %36 = vector.broadcast %cst_9 : f32 to vector<16x128xf32>
    %37 = arith.select %30, %20, %36 : vector<16x128xi1>, vector<16x128xf32>
    %38 = arith.divf %37, %35 : vector<16x128xf32>
    %39 = math.log %38 : vector<16x128xf32>
    %40 = math.absf %39 : vector<16x128xf32>
    %cst_10 = arith.constant 5.000000e-01 : f32
    %41 = vector.broadcast %cst_10 : f32 to vector<16x128xf32>
    %42 = arith.mulf %41, %40 : vector<16x128xf32>
    %43 = arith.mulf %33, %33 : vector<16x128xf32>
    %cst_11 = arith.constant 0.000000e+00 : f32
    %44 = vector.broadcast %cst_11 : f32 to vector<16x128xf32>
    %45 = arith.select %30, %43, %44 : vector<16x128xi1>, vector<16x128xf32>
    %46 = vector.shape_cast %45 : vector<16x128xf32> to vector<1x16x128xf32>
    %cst_12 = arith.constant dense<0.000000e+00> : vector<1xf32>
    %47 = vector.multi_reduction <add>, %46, %cst_12 [1, 2] : vector<1x16x128xf32> to vector<1xf32>
    %48 = vector.shape_cast %47 : vector<1xf32> to vector<1x1x1xf32>
    %49 = vector.extract %48[0, 0, 0] : f32 from vector<1x1x1xf32>
    %50 = vector.broadcast %49 : f32 to vector<1x1xf32>
    %cst_13 = arith.constant 0.000000e+00 : f32
    %51 = vector.broadcast %cst_13 : f32 to vector<16x128xf32>
    %52 = arith.select %30, %20, %51 : vector<16x128xi1>, vector<16x128xf32>
    %53 = vector.shape_cast %52 : vector<16x128xf32> to vector<1x16x128xf32>
    %cst_14 = arith.constant dense<0.000000e+00> : vector<1xf32>
    %54 = vector.multi_reduction <add>, %53, %cst_14 [1, 2] : vector<1x16x128xf32> to vector<1xf32>
    %55 = vector.shape_cast %54 : vector<1xf32> to vector<1x1x1xf32>
    %56 = vector.extract %55[0, 0, 0] : f32 from vector<1x1x1xf32>
    %57 = vector.broadcast %56 : f32 to vector<1x1xf32>
    %58 = vector.shape_cast %42 : vector<16x128xf32> to vector<1x16x128xf32>
    %cst_15 = arith.constant dense<0.000000e+00> : vector<1xf32>
    %59 = vector.multi_reduction <add>, %58, %cst_15 [1, 2] : vector<1x16x128xf32> to vector<1xf32>
    %60 = vector.shape_cast %59 : vector<1xf32> to vector<1x1x1xf32>
    %61 = vector.extract %60[0, 0, 0] : f32 from vector<1x1x1xf32>
    %62 = vector.broadcast %61 : f32 to vector<1x1xf32>
    %63 = tpu.iota {dimensions = array<i32: 1>} : vector<1x128xi32>
    %c0_i32 = arith.constant 0 : i32
    %64 = vector.broadcast %c0_i32 : i32 to vector<1x128xi32>
    %65 = arith.cmpi eq, %63, %64 : vector<1x128xi32>
    %66 = arith.extui %65 : vector<1x128xi1> to vector<1x128xi32>
    %67 = arith.sitofp %66 : vector<1x128xi32> to vector<1x128xf32>
    %68 = vector.broadcast %50 : vector<1x1xf32> to vector<1x128xf32>
    %69 = arith.mulf %68, %67 : vector<1x128xf32>
    %c1_i32 = arith.constant 1 : i32
    %70 = vector.broadcast %c1_i32 : i32 to vector<1x128xi32>
    %71 = arith.cmpi eq, %63, %70 : vector<1x128xi32>
    %72 = arith.extui %71 : vector<1x128xi1> to vector<1x128xi32>
    %73 = arith.sitofp %72 : vector<1x128xi32> to vector<1x128xf32>
    %74 = vector.broadcast %57 : vector<1x1xf32> to vector<1x128xf32>
    %75 = arith.mulf %74, %73 : vector<1x128xf32>
    %76 = arith.addf %69, %75 : vector<1x128xf32>
    %c2_i32 = arith.constant 2 : i32
    %77 = vector.broadcast %c2_i32 : i32 to vector<1x128xi32>
    %78 = arith.cmpi eq, %63, %77 : vector<1x128xi32>
    %79 = arith.extui %78 : vector<1x128xi1> to vector<1x128xi32>
    %80 = arith.sitofp %79 : vector<1x128xi32> to vector<1x128xf32>
    %81 = vector.broadcast %62 : vector<1x1xf32> to vector<1x128xf32>
    %82 = arith.mulf %81, %80 : vector<1x128xf32>
    %83 = arith.addf %76, %82 : vector<1x128xf32>
    %c0_16 = arith.constant 0 : index
    %c0_17 = arith.constant 0 : index
    %c0_18 = arith.constant 0 : index
    %c0_19 = arith.constant 0 : index
    %84 = vector.load %arg5[%c0_16, %c0_17, %c0_18, %c0_19] : memref<1x1x1x128xf32, #tpu.memory_space<vmem>>, vector<1x1x1x128xf32>
    %85 = vector.shape_cast %84 : vector<1x1x1x128xf32> to vector<1x128xf32>
    %86 = vector.shape_cast %83 : vector<1x128xf32> to vector<1x1x1x128xf32>
    tpu.vector_store %arg5[%c0_16, %c0_17, %c0_18, %c0_19], %86 {strides = array<i32>} : memref<1x1x1x128xf32, #tpu.memory_space<vmem>>, vector<1x1x1x128xf32>,
    return
  }
  func.func @transform_0(%arg0: i32, %arg1: i32) -> (i32, i32, i32) {
    %c0_i32 = arith.constant 0 : i32
    %c0_i32_0 = arith.constant 0 : i32
    return %arg0, %arg1, %c0_i32 : i32, i32, i32
  }
  func.func @transform_1(%arg0: i32, %arg1: i32) -> (i32, i32, i32) {
    %c0_i32 = arith.constant 0 : i32
    %c0_i32_0 = arith.constant 0 : i32
    return %arg0, %arg1, %c0_i32 : i32, i32, i32
  }
  func.func @transform_2(%arg0: i32, %arg1: i32) -> (i32, i32) {
    %c0_i32 = arith.constant 0 : i32
    %c0_i32_0 = arith.constant 0 : i32
    %c0_i32_1 = arith.constant 0 : i32
    return %c0_i32, %c0_i32_0 : i32, i32
  }
  func.func @transform_3(%arg0: i32, %arg1: i32) -> (i32, i32, i32, i32) {
    %c0_i32 = arith.constant 0 : i32
    %c0_i32_0 = arith.constant 0 : i32
    %c0_i32_1 = arith.constant 0 : i32
    return %arg0, %arg1, %c0_i32, %c0_i32_0 : i32, i32, i32, i32
  }
}

module attributes {stable_mosaic.version = 11 : i64} {
  func.func @_stft_sums_kernel(%arg0: i32, %arg1: i32, %arg2: memref<1x32x64xbf16, #tpu.memory_space<vmem>>, %arg3: memref<1x32x64xbf16, #tpu.memory_space<vmem>>, %arg4: memref<64x256xbf16, #tpu.memory_space<vmem>>, %arg5: memref<1x1x1x128xf32, #tpu.memory_space<vmem>>) attributes {dimension_semantics = [#tpu.dimension_semantics<parallel>, #tpu.dimension_semantics<parallel>], iteration_bounds = array<i64: 2, 1>, scalar_prefetch = 0 : i64, scratch_operands = 0 : i64, tpu.core_type = #tpu.core_type<tc>, window_params = [{transform_indices = @transform_0, window_bounds = array<i64: 1, 32, 64>}, {transform_indices = @transform_1, window_bounds = array<i64: 1, 32, 64>}, {pipeline_mode = #tpu.pipeline_mode<synchronous>, transform_indices = @transform_2, window_bounds = array<i64: 64, 256>}, {transform_indices = @transform_3, window_bounds = array<i64: 1, 1, 1, 128>}]} {
    %c0 = arith.constant 0 : index
    %c0_0 = arith.constant 0 : index
    %0 = vector.load %arg4[%c0, %c0_0] : memref<64x256xbf16, #tpu.memory_space<vmem>>, vector<64x256xbf16>
    %c0_1 = arith.constant 0 : index
    %c0_2 = arith.constant 0 : index
    %c0_3 = arith.constant 0 : index
    %1 = vector.load %arg2[%c0_1, %c0_2, %c0_3] : memref<1x32x64xbf16, #tpu.memory_space<vmem>>, vector<1x32x64xbf16>
    %2 = vector.shape_cast %1 : vector<1x32x64xbf16> to vector<32x64xbf16>
    %cst = arith.constant dense<0.000000e+00> : vector<32x256xf32>
    %3 = tpu.matmul %2, %0, %cst {dimension_numbers = #tpu.dot_dimension_numbers<[1], [0], [0], [1], [0, 0, 1, 1], [], []>} : vector<32x64xbf16>, vector<64x256xbf16>, vector<32x256xf32> -> vector<32x256xf32>
    %c0_4 = arith.constant 0 : index
    %c0_5 = arith.constant 0 : index
    %c0_6 = arith.constant 0 : index
    %4 = vector.load %arg3[%c0_4, %c0_5, %c0_6] : memref<1x32x64xbf16, #tpu.memory_space<vmem>>, vector<1x32x64xbf16>
    %5 = vector.shape_cast %4 : vector<1x32x64xbf16> to vector<32x64xbf16>
    %cst_7 = arith.constant dense<0.000000e+00> : vector<32x256xf32>
    %6 = tpu.matmul %5, %0, %cst_7 {dimension_numbers = #tpu.dot_dimension_numbers<[1], [0], [0], [1], [0, 0, 1, 1], [], []>} : vector<32x64xbf16>, vector<64x256xbf16>, vector<32x256xf32> -> vector<32x256xf32>
    %7 = vector.extract_strided_slice %3 {offsets = [0, 0], sizes = [32, 128], strides = [1, 1]} : vector<32x256xf32> to vector<32x128xf32>
    %8 = vector.extract_strided_slice %3 {offsets = [0, 0], sizes = [32, 128], strides = [1, 1]} : vector<32x256xf32> to vector<32x128xf32>
    %9 = arith.mulf %7, %8 : vector<32x128xf32>
    %10 = vector.extract_strided_slice %3 {offsets = [0, 128], sizes = [32, 128], strides = [1, 1]} : vector<32x256xf32> to vector<32x128xf32>
    %11 = vector.extract_strided_slice %3 {offsets = [0, 128], sizes = [32, 128], strides = [1, 1]} : vector<32x256xf32> to vector<32x128xf32>
    %12 = arith.mulf %10, %11 : vector<32x128xf32>
    %13 = arith.addf %9, %12 : vector<32x128xf32>
    %14 = vector.extract_strided_slice %6 {offsets = [0, 0], sizes = [32, 128], strides = [1, 1]} : vector<32x256xf32> to vector<32x128xf32>
    %15 = vector.extract_strided_slice %6 {offsets = [0, 0], sizes = [32, 128], strides = [1, 1]} : vector<32x256xf32> to vector<32x128xf32>
    %16 = arith.mulf %14, %15 : vector<32x128xf32>
    %17 = vector.extract_strided_slice %6 {offsets = [0, 128], sizes = [32, 128], strides = [1, 1]} : vector<32x256xf32> to vector<32x128xf32>
    %18 = vector.extract_strided_slice %6 {offsets = [0, 128], sizes = [32, 128], strides = [1, 1]} : vector<32x256xf32> to vector<32x128xf32>
    %19 = arith.mulf %17, %18 : vector<32x128xf32>
    %20 = arith.addf %16, %19 : vector<32x128xf32>
    %21 = tpu.iota {dimensions = array<i32: 0>} : vector<32x128xi32>
    %c32_i32 = arith.constant 32 : i32
    %22 = arith.muli %arg1, %c32_i32 : i32
    %23 = vector.broadcast %22 : i32 to vector<32x128xi32>
    %24 = arith.addi %21, %23 : vector<32x128xi32>
    %25 = tpu.iota {dimensions = array<i32: 1>} : vector<32x128xi32>
    %c17_i32 = arith.constant 17 : i32
    %26 = vector.broadcast %c17_i32 : i32 to vector<32x128xi32>
    %27 = arith.cmpi slt, %24, %26 : vector<32x128xi32>
    %c33_i32 = arith.constant 33 : i32
    %28 = vector.broadcast %c33_i32 : i32 to vector<32x128xi32>
    %29 = arith.cmpi slt, %25, %28 : vector<32x128xi32>
    %30 = arith.andi %27, %29 : vector<32x128xi1>
    %31 = math.sqrt %13 : vector<32x128xf32>
    %32 = math.sqrt %20 : vector<32x128xf32>
    %33 = arith.subf %32, %31 : vector<32x128xf32>
    %cst_8 = arith.constant 1.000000e+00 : f32
    %34 = vector.broadcast %cst_8 : f32 to vector<32x128xf32>
    %35 = arith.select %30, %13, %34 : vector<32x128xi1>, vector<32x128xf32>
    %cst_9 = arith.constant 1.000000e+00 : f32
    %36 = vector.broadcast %cst_9 : f32 to vector<32x128xf32>
    %37 = arith.select %30, %20, %36 : vector<32x128xi1>, vector<32x128xf32>
    %38 = arith.divf %37, %35 : vector<32x128xf32>
    %39 = math.log %38 : vector<32x128xf32>
    %40 = math.absf %39 : vector<32x128xf32>
    %cst_10 = arith.constant 5.000000e-01 : f32
    %41 = vector.broadcast %cst_10 : f32 to vector<32x128xf32>
    %42 = arith.mulf %41, %40 : vector<32x128xf32>
    %43 = arith.mulf %33, %33 : vector<32x128xf32>
    %cst_11 = arith.constant 0.000000e+00 : f32
    %44 = vector.broadcast %cst_11 : f32 to vector<32x128xf32>
    %45 = arith.select %30, %43, %44 : vector<32x128xi1>, vector<32x128xf32>
    %46 = vector.shape_cast %45 : vector<32x128xf32> to vector<1x32x128xf32>
    %cst_12 = arith.constant dense<0.000000e+00> : vector<1xf32>
    %47 = vector.multi_reduction <add>, %46, %cst_12 [1, 2] : vector<1x32x128xf32> to vector<1xf32>
    %48 = vector.shape_cast %47 : vector<1xf32> to vector<1x1x1xf32>
    %49 = vector.extract %48[0, 0, 0] : f32 from vector<1x1x1xf32>
    %50 = vector.broadcast %49 : f32 to vector<1x1xf32>
    %cst_13 = arith.constant 0.000000e+00 : f32
    %51 = vector.broadcast %cst_13 : f32 to vector<32x128xf32>
    %52 = arith.select %30, %20, %51 : vector<32x128xi1>, vector<32x128xf32>
    %53 = vector.shape_cast %52 : vector<32x128xf32> to vector<1x32x128xf32>
    %cst_14 = arith.constant dense<0.000000e+00> : vector<1xf32>
    %54 = vector.multi_reduction <add>, %53, %cst_14 [1, 2] : vector<1x32x128xf32> to vector<1xf32>
    %55 = vector.shape_cast %54 : vector<1xf32> to vector<1x1x1xf32>
    %56 = vector.extract %55[0, 0, 0] : f32 from vector<1x1x1xf32>
    %57 = vector.broadcast %56 : f32 to vector<1x1xf32>
    %58 = vector.shape_cast %42 : vector<32x128xf32> to vector<1x32x128xf32>
    %cst_15 = arith.constant dense<0.000000e+00> : vector<1xf32>
    %59 = vector.multi_reduction <add>, %58, %cst_15 [1, 2] : vector<1x32x128xf32> to vector<1xf32>
    %60 = vector.shape_cast %59 : vector<1xf32> to vector<1x1x1xf32>
    %61 = vector.extract %60[0, 0, 0] : f32 from vector<1x1x1xf32>
    %62 = vector.broadcast %61 : f32 to vector<1x1xf32>
    %63 = tpu.iota {dimensions = array<i32: 1>} : vector<1x128xi32>
    %c0_i32 = arith.constant 0 : i32
    %64 = vector.broadcast %c0_i32 : i32 to vector<1x128xi32>
    %65 = arith.cmpi eq, %63, %64 : vector<1x128xi32>
    %66 = arith.extui %65 : vector<1x128xi1> to vector<1x128xi32>
    %67 = arith.sitofp %66 : vector<1x128xi32> to vector<1x128xf32>
    %68 = vector.broadcast %50 : vector<1x1xf32> to vector<1x128xf32>
    %69 = arith.mulf %68, %67 : vector<1x128xf32>
    %c1_i32 = arith.constant 1 : i32
    %70 = vector.broadcast %c1_i32 : i32 to vector<1x128xi32>
    %71 = arith.cmpi eq, %63, %70 : vector<1x128xi32>
    %72 = arith.extui %71 : vector<1x128xi1> to vector<1x128xi32>
    %73 = arith.sitofp %72 : vector<1x128xi32> to vector<1x128xf32>
    %74 = vector.broadcast %57 : vector<1x1xf32> to vector<1x128xf32>
    %75 = arith.mulf %74, %73 : vector<1x128xf32>
    %76 = arith.addf %69, %75 : vector<1x128xf32>
    %c2_i32 = arith.constant 2 : i32
    %77 = vector.broadcast %c2_i32 : i32 to vector<1x128xi32>
    %78 = arith.cmpi eq, %63, %77 : vector<1x128xi32>
    %79 = arith.extui %78 : vector<1x128xi1> to vector<1x128xi32>
    %80 = arith.sitofp %79 : vector<1x128xi32> to vector<1x128xf32>
    %81 = vector.broadcast %62 : vector<1x1xf32> to vector<1x128xf32>
    %82 = arith.mulf %81, %80 : vector<1x128xf32>
    %83 = arith.addf %76, %82 : vector<1x128xf32>
    %c0_16 = arith.constant 0 : index
    %c0_17 = arith.constant 0 : index
    %c0_18 = arith.constant 0 : index
    %c0_19 = arith.constant 0 : index
    %84 = vector.load %arg5[%c0_16, %c0_17, %c0_18, %c0_19] : memref<1x1x1x128xf32, #tpu.memory_space<vmem>>, vector<1x1x1x128xf32>
    %85 = vector.shape_cast %84 : vector<1x1x1x128xf32> to vector<1x128xf32>
    %86 = vector.shape_cast %83 : vector<1x128xf32> to vector<1x1x1x128xf32>
    tpu.vector_store %arg5[%c0_16, %c0_17, %c0_18, %c0_19], %86 {strides = array<i32>} : memref<1x1x1x128xf32, #tpu.memory_space<vmem>>, vector<1x1x1x128xf32>,
    return
  }
  func.func @transform_0(%arg0: i32, %arg1: i32) -> (i32, i32, i32) {
    %c0_i32 = arith.constant 0 : i32
    %c0_i32_0 = arith.constant 0 : i32
    return %arg0, %arg1, %c0_i32 : i32, i32, i32
  }
  func.func @transform_1(%arg0: i32, %arg1: i32) -> (i32, i32, i32) {
    %c0_i32 = arith.constant 0 : i32
    %c0_i32_0 = arith.constant 0 : i32
    return %arg0, %arg1, %c0_i32 : i32, i32, i32
  }
  func.func @transform_2(%arg0: i32, %arg1: i32) -> (i32, i32) {
    %c0_i32 = arith.constant 0 : i32
    %c0_i32_0 = arith.constant 0 : i32
    %c0_i32_1 = arith.constant 0 : i32
    return %c0_i32, %c0_i32_0 : i32, i32
  }
  func.func @transform_3(%arg0: i32, %arg1: i32) -> (i32, i32, i32, i32) {
    %c0_i32 = arith.constant 0 : i32
    %c0_i32_0 = arith.constant 0 : i32
    %c0_i32_1 = arith.constant 0 : i32
    return %arg0, %arg1, %c0_i32, %c0_i32_0 : i32, i32, i32, i32
  }
}

</mosaic_0001>

<llo_original>
// kernel: multi_resolution_stft_loss.3
$region0: #{multi_resolution_stft_loss.3}
  #allocation0 [shape = 'u32[]', space=smem, size = 0x4, offset = 0x4, fixed_abs, tag = 'smem constant byte address 0x4 - core index']
  #allocation1 [shape = 'u32[72,128]{1,0:T(1,128)}', space=vmem, size = 0x9000, scoped, tag = 'internal scratch']
  %s0 = inlined_call_operand.vmem [shape: bf16[2,16,128], index: 0, kind: input, shape index: {}]
  %s1 = inlined_call_operand.vmem [shape: bf16[2,16,128], index: 1, kind: input, shape index: {}]
  %s2 = inlined_call_operand.vmem [shape: bf16[128,256], index: 2, kind: input, shape index: {}]
  %s3 = inlined_call_operand.vmem [shape: f32[2,1,1,128], index: 3, kind: output, shape index: {}]
  %s4 = sld [smem:[#allocation0]]
  $region45: #{multi_resolution_stft_loss.3} parent=0
    _
  %s6 = ssub.s32 1, %s4
  %s7 = scalar_select 0, %s6, %s4
  loop: start=0, step=1, limit=4
  $region2: #{multi_resolution_stft_loss.3} parent=0 // loop_pre_header
    _
  $region3: #{multi_resolution_stft_loss.3} parent=0 // loop_header
    %s9 = sphi 0, %s13
    %p10 = scmp.ge.s32.totalorder %s9, 4
    %s16 = sphi 0, %s28
    %s17 = sphi 0, %s24
    %s18 = sphi 0, %s16
    %s19 = sphi 0, %s17
    %s20 = sphi 0, %s18
    %s21 = sphi 0, %s19
    %s33 = sphi 0, %s35
    %s36 = sphi 0, %s33
    %s37 = sphi 0, %s36
    %s53 = sphi 0, %s37
    %s61 = sphi 0, %s63
    %s64 = sphi 0, %s61
    %s65 = sphi 0, %s64
    %s81 = sphi 0, %s65
    %s85 = sphi 0, %s85
    %s87 = sphi 0, %s85
    %s88 = sphi 0, %s87
    %s102 = sphi 0, %s88
    %s110 = sphi 0, %s112
    %s113 = sphi 0, %s110
    %s114 = sphi 0, %s113
    %s130 = sphi 0, %s114
  $region4: #{multi_resolution_stft_loss.3} parent=0 // loop_header_branch
    %12 = sbr.rel (%p10) target = $region8
  $region5: #{multi_resolution_stft_loss.3} parent=0 // loop_body
    %s14 = ssub.s32 %s9, 1
    %s15 = ssub.s32 %s9, 2
    %s22 = sadd.s32 1, %s17
    %p23 = scmp.ge.s32.totalorder %s22, 1
    %s24 = scalar_select %p23, 0, %s22
    %s25 = sadd.s32 1, %s16
    %s26 = scalar_select %p23, %s25, %s16
    %p27 = scmp.ge.s32.totalorder %s26, 2
    %s28 = scalar_select %p27, 0, %s26
    %s29 = ssub.s32 %s16, %s28
    %s30 = ssub.s32 %s17, %s24
    %s31 = sor.u32 %s29, %s30
    %p32 = scmp.eq.s32.totalorder %s31, 0
    %s34 = sadd.s32 %s33, 1
    %s35 = scalar_select %p32, %s33, %s34
    %p38 = pneg %p32
    %p39 = scmp.eq.s32.totalorder %s9, 1
    %p40 = por %p38, %p39
    %p41 = scmp.ne.s32.totalorder %s33, %s36
    %p42 = scmp.eq.s32.totalorder %s9, 0
    %p43 = por %p41, %p42
    %p44 = scmp.ne.s32.totalorder %s33, %s36
    %p45 = scmp.eq.s32.totalorder %s14, 1
    %p46 = por %p44, %p45
    %p47 = scmp.ne.s32.totalorder %s36, %s37
    %p48 = scmp.eq.s32.totalorder %s14, 0
    %p49 = por %p47, %p48
    %p50 = scmp.ne.s32.totalorder %s36, %s37
    %p51 = scmp.eq.s32.totalorder %s15, 1
    %p52 = por %p50, %p51
    %p54 = scmp.ne.s32.totalorder %s37, %s53
    %p55 = scmp.eq.s32.totalorder %s15, 0
    %p56 = por %p54, %p55
    %s57 = ssub.s32 %s16, %s28
    %s58 = ssub.s32 %s17, %s24
    %s59 = sor.u32 %s57, %s58
    %p60 = scmp.eq.s32.totalorder %s59, 0
    %s62 = sadd.s32 %s61, 1
    %s63 = scalar_select %p60, %s61, %s62
    %p66 = pneg %p60
    %p67 = scmp.eq.s32.totalorder %s9, 1
    %p68 = por %p66, %p67
    %p69 = scmp.ne.s32.totalorder %s61, %s64
    %p70 = scmp.eq.s32.totalorder %s9, 0
    %p71 = por %p69, %p70
    %p72 = scmp.ne.s32.totalorder %s61, %s64
    %p73 = scmp.eq.s32.totalorder %s14, 1
    %p74 = por %p72, %p73
    %p75 = scmp.ne.s32.totalorder %s64, %s65
    %p76 = scmp.eq.s32.totalorder %s14, 0
    %p77 = por %p75, %p76
    %p78 = scmp.ne.s32.totalorder %s64, %s65
    %p79 = scmp.eq.s32.totalorder %s15, 1
    %p80 = por %p78, %p79
    %p82 = scmp.ne.s32.totalorder %s65, %s81
    %p83 = scmp.eq.s32.totalorder %s15, 0
    %p84 = por %p82, %p83
    %s86 = sadd.s32 %s85, 1
    %p89 = scmp.eq.s32.totalorder %s9, 1
    %p90 = scmp.ne.s32.totalorder %s85, %s87
    %p91 = scmp.eq.s32.totalorder %s9, 0
    %p92 = por %p90, %p91
    %p93 = scmp.ne.s32.totalorder %s85, %s87
    %p94 = scmp.eq.s32.totalorder %s14, 1
    %p95 = por %p93, %p94
    %p96 = scmp.ne.s32.totalorder %s87, %s88
    %p97 = scmp.eq.s32.totalorder %s14, 0
    %p98 = por %p96, %p97
    %p99 = scmp.ne.s32.totalorder %s87, %s88
    %p100 = scmp.eq.s32.totalorder %s15, 1
    %p101 = por %p99, %p100
    %p103 = scmp.ne.s32.totalorder %s88, %s102
    %p104 = scmp.eq.s32.totalorder %s15, 0
    %p105 = por %p103, %p104
    %s106 = ssub.s32 %s16, %s28
    %s107 = ssub.s32 %s17, %s24
    %s108 = sor.u32 %s106, %s107
    %p109 = scmp.eq.s32.totalorder %s108, 0
    %s111 = sadd.s32 %s110, 1
    %s112 = scalar_select %p109, %s110, %s111
    %p115 = pneg %p109
    %p116 = scmp.eq.s32.totalorder %s9, 1
    %p117 = por %p115, %p116
    %p118 = scmp.ne.s32.totalorder %s110, %s113
    %p119 = scmp.eq.s32.totalorder %s9, 0
    %p120 = por %p118, %p119
    %p121 = scmp.ne.s32.totalorder %s110, %s113
    %p122 = scmp.eq.s32.totalorder %s14, 1
    %p123 = por %p121, %p122
    %p124 = scmp.ne.s32.totalorder %s113, %s114
    %p125 = scmp.eq.s32.totalorder %s14, 0
    %p126 = por %p124, %p125
    %p127 = scmp.ne.s32.totalorder %s113, %s114
    %p128 = scmp.eq.s32.totalorder %s15, 1
    %p129 = por %p127, %p128
    %p131 = scmp.ne.s32.totalorder %s114, %s130
    %p132 = scmp.eq.s32.totalorder %s15, 0
    %p133 = por %p131, %p132
    %p134 = scmp.le.s32.totalorder 1, %s9
    %p135 = scmp.lt.s32.totalorder %s9, 3
    %p136 = pnand %p134, %p135
    %p137 = pneg %p136
    // Predicated region
    $region9: #{multi_resolution_stft_loss.3} parent=5 // pred_check
      _
    $region10: #{multi_resolution_stft_loss.3} parent=5 // pred_check_branch
      %139 = sbr.rel (%p136) target = $region12
    $region11: #{multi_resolution_stft_loss.3} parent=5 // pred_region
      %s140 = ssub.s32 %s9, 1
      // Predicated region
      $region13: #{multi_resolution_stft_loss.3} parent=11 // pred_check
        %p141 = pneg %p98
      $region14: #{multi_resolution_stft_loss.3} parent=11 // pred_check_branch
        %143 = sbr.rel (%p141) target = $region16
      $region15: #{multi_resolution_stft_loss.3} parent=11 // pred_region
        _
      $region16: #{multi_resolution_stft_loss.3} parent=11 // pred_fallthru
        _
    $region12: #{multi_resolution_stft_loss.3} parent=5 // pred_fallthru
      _
    %p144 = scmp.lt.s32.totalorder %s9, 2
    // Predicated region
    $region17: #{multi_resolution_stft_loss.3} parent=5 // pred_check
      %p145 = pneg %p144
    $region18: #{multi_resolution_stft_loss.3} parent=5 // pred_check_branch
      %147 = sbr.rel (%p145) target = $region20
    $region19: #{multi_resolution_stft_loss.3} parent=5 // pred_region
      // Predicated region
      $region21: #{multi_resolution_stft_loss.3} parent=19 // pred_check
        %p148 = pneg %p43
      $region22: #{multi_resolution_stft_loss.3} parent=19 // pred_check_branch
        %150 = sbr.rel (%p148) target = $region24
      $region23: #{multi_resolution_stft_loss.3} parent=19 // pred_region
        %s151 = smul.u32 2, %s17
        %p152 = scmp.lt.s32.totalorder %s16, 1
        %s153 = scalar_select %p152, %s16, 1
        %p154 = scmp.lt.s32.totalorder %s151, 1
        %s155 = scalar_select %p154, %s151, 1
        %s156 = smul.addr %s153, 2
        %s157 = sadd.s32 %s155, %s156
        %s158 = smul.addr %s157, 4
        %s159 = scalar_lea.vmem %s0, %s158
        %s160 = smul.u32 2, %s17
      $region24: #{multi_resolution_stft_loss.3} parent=19 // pred_fallthru
        _
      // Predicated region
      $region25: #{multi_resolution_stft_loss.3} parent=19 // pred_check
        %p161 = pneg %p71
      $region26: #{multi_resolution_stft_loss.3} parent=19 // pred_check_branch
        %163 = sbr.rel (%p161) target = $region28
      $region27: #{multi_resolution_stft_loss.3} parent=19 // pred_region
        %s164 = smul.u32 2, %s17
        %p165 = scmp.lt.s32.totalorder %s16, 1
        %s166 = scalar_select %p165, %s16, 1
        %p167 = scmp.lt.s32.totalorder %s164, 1
        %s168 = scalar_select %p167, %s164, 1
        %s169 = smul.addr %s166, 2
        %s170 = sadd.s32 %s168, %s169
        %s171 = smul.addr %s170, 4
        %s172 = scalar_lea.vmem %s1, %s171
        %s173 = smul.u32 2, %s17
      $region28: #{multi_resolution_stft_loss.3} parent=19 // pred_fallthru
        _
    $region20: #{multi_resolution_stft_loss.3} parent=5 // pred_fallthru
      _
    %p174 = scmp.le.s32.totalorder 1, %s9
    %p175 = scmp.lt.s32.totalorder %s9, 3
    %p176 = pnand %p174, %p175
    %p177 = pneg %p176
    // Predicated region
    $region29: #{multi_resolution_stft_loss.3} parent=5 // pred_check
      _
    $region30: #{multi_resolution_stft_loss.3} parent=5 // pred_check_branch
      %179 = sbr.rel (%p176) target = $region32
    $region31: #{multi_resolution_stft_loss.3} parent=5 // pred_region
      %s180 = ssub.s32 %s9, 1
      %s181 = smul.u32 2, %s19
      %p182 = scmp.lt.s32.totalorder %s18, 1
      %s183 = scalar_select %p182, %s18, 1
      %p184 = scmp.lt.s32.totalorder %s181, 1
      %s185 = scalar_select %p184, %s181, 1
      %s186 = smul.addr %s183, 2
      %s187 = sadd.s32 %s185, %s186
      %s188 = smul.addr %s187, 4
      %s189 = scalar_lea.vmem %s0, %s188
      %p190 = pneg %p49
      %p191 = pneg %p46
      %s192 = smul.u32 2, %s19
      %p193 = scmp.lt.s32.totalorder %s18, 1
      %s194 = scalar_select %p193, %s18, 1
      %p195 = scmp.lt.s32.totalorder %s192, 1
      %s196 = scalar_select %p195, %s192, 1
      %s197 = smul.addr %s194, 2
      %s198 = sadd.s32 %s196, %s197
      %s199 = smul.addr %s198, 4
      %s200 = scalar_lea.vmem %s1, %s199
      %p201 = pneg %p77
      %p202 = pneg %p74
      %p203 = pneg %p98
      %p204 = pneg %p95
      %p205 = pneg %p126
      %p206 = pneg %p123
      %p207 = scmp.lt.s32.totalorder %s18, 1
      %s208 = scalar_select %p207, %s18, 1
      %p209 = scmp.lt.s32.totalorder %s19, 0
      %s210 = scalar_select %p209, %s19, 0
      %s211 = sadd.s32 %s210, %s208
      %s212 = scalar_lea.vmem %s3, %s211
      %s213 = smul.u32 2, %s19
      %p214 = scmp.lt.s32.totalorder %s18, 1
      %s215 = scalar_select %p214, %s18, 1
      %p216 = scmp.lt.s32.totalorder %s213, 1
      %s217 = scalar_select %p216, %s213, 1
      %s218 = smul.addr %s215, 2
      %s219 = sadd.s32 %s217, %s218
      %s220 = smul.addr %s219, 4
      %s221 = scalar_lea.vmem %s0, %s220
      %s222 = smul.u32 2, %s19
      %s223 = smul.u32 2, %s19
      %p224 = scmp.lt.s32.totalorder %s18, 1
      %s225 = scalar_select %p224, %s18, 1
      %p226 = scmp.lt.s32.totalorder %s223, 1
      %s227 = scalar_select %p226, %s223, 1
      %s228 = smul.addr %s225, 2
      %s229 = sadd.s32 %s227, %s228
      %s230 = smul.addr %s229, 4
      %s231 = scalar_lea.vmem %s1, %s230
      %s232 = smul.u32 2, %s19
      %p233 = scmp.lt.s32.totalorder %s18, 1
      %s234 = scalar_select %p233, %s18, 1
      %p235 = scmp.lt.s32.totalorder %s19, 0
      %s236 = scalar_select %p235, %s19, 0
      %s237 = sadd.s32 %s236, %s234
      %s238 = scalar_lea.vmem %s3, %s237
      %v239 = vld [vmem:[%s2] sm:$0xff]
      %v240 = vld [vmem:[%s2 + $0x8] sm:$0xff]
      %v241 = vld [vmem:[%s2 + $0x10] sm:$0xff]
      %v242 = vld [vmem:[%s2 + $0x18] sm:$0xff]
      %v243 = vld [vmem:[%s2 + $0x20] sm:$0xff]
      %v244 = vld [vmem:[%s2 + $0x28] sm:$0xff]
      %v245 = vld [vmem:[%s2 + $0x30] sm:$0xff]
      %v246 = vld [vmem:[%s2 + $0x38] sm:$0xff]
      %v247 = vld [vmem:[%s2 + $0x40] sm:$0xff]
      %v248 = vld [vmem:[%s2 + $0x48] sm:$0xff]
      %v249 = vld [vmem:[%s2 + $0x50] sm:$0xff]
      %v250 = vld [vmem:[%s2 + $0x58] sm:$0xff]
      %v251 = vld [vmem:[%s2 + $0x60] sm:$0xff]
      %v252 = vld [vmem:[%s2 + $0x68] sm:$0xff]
      %v253 = vld [vmem:[%s2 + $0x70] sm:$0xff]
      %v254 = vld [vmem:[%s2 + $0x78] sm:$0xff]
      %v255 = vld [vmem:[%s221] sm:$0xf]
      %v256 = vld [vmem:[%s221 + $0x4] sm:$0xf]
      %v259 = vunpack.c.l.b16 %v255
      %v260 = vunpack.c.l.b16 %v256
      %v261 = vpack.c.b16 %v260, %v259
      %v279 = vunpack.c.l.b16 %v239
      %v280 = vunpack.c.h.b16 %v239
      %v281 = vunpack.c.l.b16 %v240
      %v282 = vunpack.c.h.b16 %v240
      %v283 = vunpack.c.l.b16 %v241
      %v284 = vunpack.c.h.b16 %v241
      %v285 = vunpack.c.l.b16 %v242
      %v286 = vunpack.c.h.b16 %v242
      %v287 = vunpack.c.l.b16 %v243
      %v288 = vunpack.c.h.b16 %v243
      %v289 = vunpack.c.l.b16 %v244
      %v290 = vunpack.c.h.b16 %v244
      %v291 = vunpack.c.l.b16 %v245
      %v292 = vunpack.c.h.b16 %v245
      %v293 = vunpack.c.l.b16 %v246
      %v294 = vunpack.c.h.b16 %v246
      %v295 = vunpack.c.l.b16 %v247
      %v296 = vunpack.c.h.b16 %v247
      %v297 = vunpack.c.l.b16 %v248
      %v298 = vunpack.c.h.b16 %v248
      %v299 = vunpack.c.l.b16 %v249
      %v300 = vunpack.c.h.b16 %v249
      %v301 = vunpack.c.l.b16 %v250
      %v302 = vunpack.c.h.b16 %v250
      %v303 = vunpack.c.l.b16 %v251
      %v304 = vunpack.c.h.b16 %v251
      %v305 = vunpack.c.l.b16 %v252
      %v306 = vunpack.c.h.b16 %v252
      %v307 = vunpack.c.l.b16 %v253
      %v308 = vunpack.c.h.b16 %v253
      %v309 = vunpack.c.l.b16 %v254
      %v310 = vunpack.c.h.b16 %v254
      %v311 = vpack.c.b16 %v281, %v279
      %v312 = vpack.c.b16 %v282, %v280
      %v313 = vpack.c.b16 %v285, %v283
      %v314 = vpack.c.b16 %v286, %v284
      %v315 = vpack.c.b16 %v289, %v287
      %v316 = vpack.c.b16 %v290, %v288
      %v317 = vpack.c.b16 %v293, %v291
      %v318 = vpack.c.b16 %v294, %v292
      %v319 = vpack.c.b16 %v297, %v295
      %v320 = vpack.c.b16 %v298, %v296
      %v321 = vpack.c.b16 %v301, %v299
      %v322 = vpack.c.b16 %v302, %v300
      %v323 = vpack.c.b16 %v305, %v303
      %v324 = vpack.c.b16 %v306, %v304
      %v325 = vpack.c.b16 %v309, %v307
      %v326 = vpack.c.b16 %v310, %v308
      %343 = vmatpush.bf16.msra.mxu0 %v325
      %344 = vmatpush.bf16.msra.mxu0 %v323
      %345 = vmatpush.bf16.msra.mxu0 %v321
      %346 = vmatpush.bf16.msra.mxu0 %v319
      %347 = vmatpush.bf16.msra.mxu0 %v317
      %348 = vmatpush.bf16.msra.mxu0 %v315
      %349 = vmatpush.bf16.msra.mxu0 %v313
      %350 = vmatpush.bf16.msra.mxu0 %v311
      %351 = vmatmul.bf16.gmra.mxu0 %v261
      %v352 = vpop.f32.mrf.mxu0
      %v353 = vadd.f32 0.0, %v352
      %v354 = vpop.f32.mrf.mxu0
      %v355 = vadd.f32 0.0, %v354
      %356 = vdwg.mxu0
      %357 = vmatpush.bf16.msra.mxu0 %v326
      %358 = vmatpush.bf16.msra.mxu0 %v324
      %359 = vmatpush.bf16.msra.mxu0 %v322
      %360 = vmatpush.bf16.msra.mxu0 %v320
      %361 = vmatpush.bf16.msra.mxu0 %v318
      %362 = vmatpush.bf16.msra.mxu0 %v316
      %363 = vmatpush.bf16.msra.mxu0 %v314
      %364 = vmatpush.bf16.msra.mxu0 %v312
      %365 = vmatmul.bf16.gmra.mxu0 %v261
      %v366 = vpop.f32.mrf.mxu0
      %v367 = vadd.f32 0.0, %v366
      %v368 = vpop.f32.mrf.mxu0
      %v369 = vadd.f32 0.0, %v368
      %370 = vdwg.mxu0
      %v371 = vld [vmem:[%s231] sm:$0xf]
      %v372 = vld [vmem:[%s231 + $0x4] sm:$0xf]
      %v375 = vunpack.c.l.b16 %v371
      %v376 = vunpack.c.l.b16 %v372
      %v377 = vpack.c.b16 %v376, %v375
      %379 = vmatpush.bf16.msra.mxu0 %v325
      %380 = vmatpush.bf16.msra.mxu0 %v323
      %381 = vmatpush.bf16.msra.mxu0 %v321
      %382 = vmatpush.bf16.msra.mxu0 %v319
      %383 = vmatpush.bf16.msra.mxu0 %v317
      %384 = vmatpush.bf16.msra.mxu0 %v315
      %385 = vmatpush.bf16.msra.mxu0 %v313
      %386 = vmatpush.bf16.msra.mxu0 %v311
      %387 = vmatmul.bf16.gmra.mxu0 %v377
      %v388 = vpop.f32.mrf.mxu0
      %v389 = vadd.f32 0.0, %v388
      %v390 = vpop.f32.mrf.mxu0
      %v391 = vadd.f32 0.0, %v390
      %392 = vdwg.mxu0
      %393 = vmatpush.bf16.msra.mxu0 %v326
      %394 = vmatpush.bf16.msra.mxu0 %v324
      %395 = vmatpush.bf16.msra.mxu0 %v322
      %396 = vmatpush.bf16.msra.mxu0 %v320
      %397 = vmatpush.bf16.msra.mxu0 %v318
      %398 = vmatpush.bf16.msra.mxu0 %v316
      %399 = vmatpush.bf16.msra.mxu0 %v314
      %400 = vmatpush.bf16.msra.mxu0 %v312
      %401 = vmatmul.bf16.gmra.mxu0 %v377
      %v402 = vpop.f32.mrf.mxu0
      %v403 = vadd.f32 0.0, %v402
      %v404 = vpop.f32.mrf.mxu0
      %v405 = vadd.f32 0.0, %v404
      %406 = vdwg.mxu0
      %v407 = vmul.f32 %v353, %v353
      %v408 = vmul.f32 %v355, %v355
      %v409 = vmul.f32 %v367, %v367
      %v410 = vmul.f32 %v369, %v369
      %v411 = vadd.f32 %v407, %v409
      %v412 = vadd.f32 %v408, %v410
      %v413 = vmul.f32 %v389, %v389
      %v414 = vmul.f32 %v391, %v391
      %v415 = vmul.f32 %v403, %v403
      %v416 = vmul.f32 %v405, %v405
      %v417 = vadd.f32 %v413, %v415
      %v418 = vadd.f32 %v414, %v416
      %v419 = vlaneseq
      %v420 = vshrl.u32 %v419, 7
      %v421 = vadd.s32 %v420, 8
      %s422 = smul.u32 %s19, 16
      %v423 = vstv %s422
      %v424 = vadd.s32 %v420, %v423
      %v425 = vadd.s32 %v421, %v423
      %v426 = vlaneseq
      %v427 = vand.u32 %v426, 127
      %vm428 = vcmp.lt.s32.totalorder %v424, 9
      %vm429 = vcmp.lt.s32.totalorder %v425, 9
      %vm430 = vcmp.lt.s32.totalorder %v427, 65
      %vm431 = vmand %vm428, %vm430
      %vm432 = vmand %vm429, %vm430
      %v433 = vrsqrt.pop %v411
      %v434 = vmul.f32 %v433, %v411
      %v435 = vmul.f32 %v434, %v433
      %v436 = vmul.f32 0.5, %v435
      %v437 = vsub.f32 1.5, %v436
      %v438 = vmul.f32 %v433, %v437
      %v439 = vmul.f32 %v411, %v438
      %vm440 = vcmp.eq.f32.partialorder %v411, inf
      %v441 = vsel %vm440, %v411, %v439
      %vm442 = vcmp.eq.f32.partialorder %v411, 0.0
      %v443 = vand.u32 %v411, 2147483648
      %v444 = vsel %vm442, %v443, %v441
      %v445 = vrsqrt.pop %v412
      %v446 = vmul.f32 %v445, %v412
      %v447 = vmul.f32 %v446, %v445
      %v448 = vmul.f32 0.5, %v447
      %v449 = vsub.f32 1.5, %v448
      %v450 = vmul.f32 %v445, %v449
      %v451 = vmul.f32 %v412, %v450
      %vm452 = vcmp.eq.f32.partialorder %v412, inf
      %v453 = vsel %vm452, %v412, %v451
      %vm454 = vcmp.eq.f32.partialorder %v412, 0.0
      %v455 = vand.u32 %v412, 2147483648
      %v456 = vsel %vm454, %v455, %v453
      %v457 = vrsqrt.pop %v417
      %v458 = vmul.f32 %v457, %v417
      %v459 = vmul.f32 %v458, %v457
      %v460 = vmul.f32 0.5, %v459
      %v461 = vsub.f32 1.5, %v460
      %v462 = vmul.f32 %v457, %v461
      %v463 = vmul.f32 %v417, %v462
      %vm464 = vcmp.eq.f32.partialorder %v417, inf
      %v465 = vsel %vm464, %v417, %v463
      %vm466 = vcmp.eq.f32.partialorder %v417, 0.0
      %v467 = vand.u32 %v417, 2147483648
      %v468 = vsel %vm466, %v467, %v465
      %v469 = vrsqrt.pop %v418
      %v470 = vmul.f32 %v469, %v418
      %v471 = vmul.f32 %v470, %v469
      %v472 = vmul.f32 0.5, %v471
      %v473 = vsub.f32 1.5, %v472
      %v474 = vmul.f32 %v469, %v473
      %v475 = vmul.f32 %v418, %v474
      %vm476 = vcmp.eq.f32.partialorder %v418, inf
      %v477 = vsel %vm476, %v418, %v475
      %vm478 = vcmp.eq.f32.partialorder %v418, 0.0
      %v479 = vand.u32 %v418, 2147483648
      %v480 = vsel %vm478, %v479, %v477
      %v481 = vsub.f32 %v468, %v444
      %v482 = vsub.f32 %v480, %v456
      %v483 = vsel %vm431, %v411, 1.0
      %v484 = vsel %vm432, %v412, 1.0
      %v485 = vsel %vm431, %v417, 1.0
      %v486 = vsel %vm432, %v418, 1.0
      %v487 = vrcp.pop %v483
      %v488 = vmul.f32 %v483, %v487
      %v489 = vsub.f32 1.0, %v488
      %v490 = vmul.f32 %v487, %v489
      %v491 = vadd.f32 %v487, %v490
      %vm492 = vweird.f32 %v483
      %vm493 = vweird.f32 %v487
      %vm494 = vmor %vm492, %vm493
      %v495 = vsel %vm494, %v487, %v491
      %v496 = vand.u32 2147483647, %v483
      %vm497 = vcmp.eq.f32.partialorder %v496, 8.507059e+37
      %v498 = vand.u32 %v483, 2147483648
      %v499 = vor.u32 1.1754944e-38, %v498
      %v500 = vsel %vm497, %v499, %v495
      %v501 = vmul.f32 %v485, %v500
      %v502 = vrcp.pop %v484
      %v503 = vmul.f32 %v484, %v502
      %v504 = vsub.f32 1.0, %v503
      %v505 = vmul.f32 %v502, %v504
      %v506 = vadd.f32 %v502, %v505
      %vm507 = vweird.f32 %v484
      %vm508 = vweird.f32 %v502
      %vm509 = vmor %vm507, %vm508
      %v510 = vsel %vm509, %v502, %v506
      %v511 = vand.u32 2147483647, %v484
      %vm512 = vcmp.eq.f32.partialorder %v511, 8.507059e+37
      %v513 = vand.u32 %v484, 2147483648
      %v514 = vor.u32 1.1754944e-38, %v513
      %v515 = vsel %vm512, %v514, %v510
      %v516 = vmul.f32 %v486, %v515
      %v517 = vlog2.pop %v501
      %v518 = vmul.f32 %v517, 0.6931472
      %v519 = vlog2.pop %v516
      %v520 = vmul.f32 %v519, 0.6931472
      %v521 = vand.u32 2147483647, %v518
      %v522 = vand.u32 2147483647, %v520
      %v523 = vmul.f32 %v521, 0.5
      %v524 = vmul.f32 %v522, 0.5
      %v525 = vmul.f32 %v481, %v481
      %v526 = vmul.f32 %v482, %v482
      %v527 = vsel %vm431, %v525, 0.0
      %v528 = vsel %vm432, %v526, 0.0
      %v529 = vadd.f32 %v527, %v528
      %530 = vadd.xlane.f32.xlu0 %v529
      %v531 = vpop.xlane.xlu0 %530
      %v532 = vrot.slane %v531, 4
      %v533 = vadd.f32 %v531, %v532
      %v534 = vrot.slane %v533, 2
      %v535 = vadd.f32 %v533, %v534
      %v536 = vrot.slane %v535, 1
      %v537 = vadd.f32 %v535, %v536
      %s538 = vtos %v537
      %v539 = vsel %vm431, %v417, 0.0
      %v540 = vsel %vm432, %v418, 0.0
      %v541 = vadd.f32 %v539, %v540
      %542 = vadd.xlane.f32.xlu0 %v541
      %v543 = vpop.xlane.xlu0 %542
      %v544 = vrot.slane %v543, 4
      %v545 = vadd.f32 %v543, %v544
      %v546 = vrot.slane %v545, 2
      %v547 = vadd.f32 %v545, %v546
      %v548 = vrot.slane %v547, 1
      %v549 = vadd.f32 %v547, %v548
      %s550 = vtos %v549
      %v551 = vadd.f32 %v523, %v524
      %552 = vadd.xlane.f32.xlu0 %v551
      %v553 = vpop.xlane.xlu0 %552
      %v554 = vrot.slane %v553, 4
      %v555 = vadd.f32 %v553, %v554
      %v556 = vrot.slane %v555, 2
      %v557 = vadd.f32 %v555, %v556
      %v558 = vrot.slane %v557, 1
      %v559 = vadd.f32 %v557, %v558
      %s560 = vtos %v559
      %vm561 = vcmp.eq.s32.totalorder %v427, 0
      %v562 = vsel %vm561, 1, 0
      %v563 = vcvt.s32.f32 %v562
      %v564 = vstv %s538
      %v565 = vmul.f32 %v564, %v563
      %vm566 = vcmp.eq.s32.totalorder %v427, 1
      %v567 = vsel %vm566, 1, 0
      %v568 = vcvt.s32.f32 %v567
      %v569 = vstv %s550
      %v570 = vmul.f32 %v569, %v568
      %v571 = vadd.f32 %v565, %v570
      %vm572 = vcmp.eq.s32.totalorder %v427, 2
      %v573 = vsel %vm572, 1, 0
      %v574 = vcvt.s32.f32 %v573
      %v575 = vstv %s560
      %v576 = vmul.f32 %v575, %v574
      %v577 = vadd.f32 %v571, %v576
      %578 = vst [vmem:[%s238] sm:$0x1] %v577
      %p579 = scmp.lt.s32.totalorder %s18, 1
      %s580 = scalar_select %p579, %s18, 1
      %p581 = scmp.lt.s32.totalorder %s19, 0
      %s582 = scalar_select %p581, %s19, 0
      %s583 = sadd.s32 %s582, %s580
      %s584 = scalar_lea.vmem %s3, %s583
      // Predicated region
      $region33: #{multi_resolution_stft_loss.3} parent=31 // pred_check
        %p585 = pneg %p123
      $region34: #{multi_resolution_stft_loss.3} parent=31 // pred_check_branch
        %587 = sbr.rel (%p585) target = $region36
      $region35: #{multi_resolution_stft_loss.3} parent=31 // pred_region
        _
      $region36: #{multi_resolution_stft_loss.3} parent=31 // pred_fallthru
        _
    $region32: #{multi_resolution_stft_loss.3} parent=5 // pred_fallthru
      _
    %p588 = scmp.le.s32.totalorder 2, %s9
    // Predicated region
    $region37: #{multi_resolution_stft_loss.3} parent=5 // pred_check
      %p589 = pneg %p588
    $region38: #{multi_resolution_stft_loss.3} parent=5 // pred_check_branch
      %591 = sbr.rel (%p589) target = $region40
    $region39: #{multi_resolution_stft_loss.3} parent=5 // pred_region
      %s592 = ssub.s32 %s9, 2
      // Predicated region
      $region41: #{multi_resolution_stft_loss.3} parent=39 // pred_check
        %p593 = pneg %p129
      $region42: #{multi_resolution_stft_loss.3} parent=39 // pred_check_branch
        %595 = sbr.rel (%p593) target = $region44
      $region43: #{multi_resolution_stft_loss.3} parent=39 // pred_region
        %p596 = scmp.lt.s32.totalorder %s20, 1
        %s597 = scalar_select %p596, %s20, 1
        %p598 = scmp.lt.s32.totalorder %s21, 0
        %s599 = scalar_select %p598, %s21, 0
        %s600 = sadd.s32 %s599, %s597
        %s601 = scalar_lea.vmem %s3, %s600
      $region44: #{multi_resolution_stft_loss.3} parent=39 // pred_fallthru
        _
    $region40: #{multi_resolution_stft_loss.3} parent=5 // pred_fallthru
      _
  $region6: #{multi_resolution_stft_loss.3} parent=0 // loop_footer
    %s13 = sadd.s32 1, %s9
  $region7: #{multi_resolution_stft_loss.3} parent=0 // loop_footer_branch
    %8 = sbr.rel target = $region3
  $region8: #{multi_resolution_stft_loss.3} parent=0 // loop_exit
    _

// kernel: multi_resolution_stft_loss.2
$region0: #{multi_resolution_stft_loss.2}
  #allocation0 [shape = 'u32[]', space=smem, size = 0x4, offset = 0x4, fixed_abs, tag = 'smem constant byte address 0x4 - core index']
  #allocation1 [shape = 'u32[72,128]{1,0:T(1,128)}', space=vmem, size = 0x9000, scoped, tag = 'internal scratch']
  %s0 = inlined_call_operand.vmem [shape: bf16[2,32,64], index: 0, kind: input, shape index: {}]
  %s1 = inlined_call_operand.vmem [shape: bf16[2,32,64], index: 1, kind: input, shape index: {}]
  %s2 = inlined_call_operand.vmem [shape: bf16[64,256], index: 2, kind: input, shape index: {}]
  %s3 = inlined_call_operand.vmem [shape: f32[2,1,1,128], index: 3, kind: output, shape index: {}]
  %s4 = sld [smem:[#allocation0]]
  $region45: #{multi_resolution_stft_loss.2} parent=0
    _
  %s6 = ssub.s32 1, %s4
  %s7 = scalar_select 0, %s6, %s4
  loop: start=0, step=1, limit=4
  $region2: #{multi_resolution_stft_loss.2} parent=0 // loop_pre_header
    _
  $region3: #{multi_resolution_stft_loss.2} parent=0 // loop_header
    %s9 = sphi 0, %s13
    %p10 = scmp.ge.s32.totalorder %s9, 4
    %s16 = sphi 0, %s28
    %s17 = sphi 0, %s24
    %s18 = sphi 0, %s16
    %s19 = sphi 0, %s17
    %s20 = sphi 0, %s18
    %s21 = sphi 0, %s19
    %s33 = sphi 0, %s35
    %s36 = sphi 0, %s33
    %s37 = sphi 0, %s36
    %s53 = sphi 0, %s37
    %s61 = sphi 0, %s63
    %s64 = sphi 0, %s61
    %s65 = sphi 0, %s64
    %s81 = sphi 0, %s65
    %s85 = sphi 0, %s85
    %s87 = sphi 0, %s85
    %s88 = sphi 0, %s87
    %s102 = sphi 0, %s88
    %s110 = sphi 0, %s112
    %s113 = sphi 0, %s110
    %s114 = sphi 0, %s113
    %s130 = sphi 0, %s114
  $region4: #{multi_resolution_stft_loss.2} parent=0 // loop_header_branch
    %12 = sbr.rel (%p10) target = $region8
  $region5: #{multi_resolution_stft_loss.2} parent=0 // loop_body
    %s14 = ssub.s32 %s9, 1
    %s15 = ssub.s32 %s9, 2
    %s22 = sadd.s32 1, %s17
    %p23 = scmp.ge.s32.totalorder %s22, 1
    %s24 = scalar_select %p23, 0, %s22
    %s25 = sadd.s32 1, %s16
    %s26 = scalar_select %p23, %s25, %s16
    %p27 = scmp.ge.s32.totalorder %s26, 2
    %s28 = scalar_select %p27, 0, %s26
    %s29 = ssub.s32 %s16, %s28
    %s30 = ssub.s32 %s17, %s24
    %s31 = sor.u32 %s29, %s30
    %p32 = scmp.eq.s32.totalorder %s31, 0
    %s34 = sadd.s32 %s33, 1
    %s35 = scalar_select %p32, %s33, %s34
    %p38 = pneg %p32
    %p39 = scmp.eq.s32.totalorder %s9, 1
    %p40 = por %p38, %p39
    %p41 = scmp.ne.s32.totalorder %s33, %s36
    %p42 = scmp.eq.s32.totalorder %s9, 0
    %p43 = por %p41, %p42
    %p44 = scmp.ne.s32.totalorder %s33, %s36
    %p45 = scmp.eq.s32.totalorder %s14, 1
    %p46 = por %p44, %p45
    %p47 = scmp.ne.s32.totalorder %s36, %s37
    %p48 = scmp.eq.s32.totalorder %s14, 0
    %p49 = por %p47, %p48
    %p50 = scmp.ne.s32.totalorder %s36, %s37
    %p51 = scmp.eq.s32.totalorder %s15, 1
    %p52 = por %p50, %p51
    %p54 = scmp.ne.s32.totalorder %s37, %s53
    %p55 = scmp.eq.s32.totalorder %s15, 0
    %p56 = por %p54, %p55
    %s57 = ssub.s32 %s16, %s28
    %s58 = ssub.s32 %s17, %s24
    %s59 = sor.u32 %s57, %s58
    %p60 = scmp.eq.s32.totalorder %s59, 0
    %s62 = sadd.s32 %s61, 1
    %s63 = scalar_select %p60, %s61, %s62
    %p66 = pneg %p60
    %p67 = scmp.eq.s32.totalorder %s9, 1
    %p68 = por %p66, %p67
    %p69 = scmp.ne.s32.totalorder %s61, %s64
    %p70 = scmp.eq.s32.totalorder %s9, 0
    %p71 = por %p69, %p70
    %p72 = scmp.ne.s32.totalorder %s61, %s64
    %p73 = scmp.eq.s32.totalorder %s14, 1
    %p74 = por %p72, %p73
    %p75 = scmp.ne.s32.totalorder %s64, %s65
    %p76 = scmp.eq.s32.totalorder %s14, 0
    %p77 = por %p75, %p76
    %p78 = scmp.ne.s32.totalorder %s64, %s65
    %p79 = scmp.eq.s32.totalorder %s15, 1
    %p80 = por %p78, %p79
    %p82 = scmp.ne.s32.totalorder %s65, %s81
    %p83 = scmp.eq.s32.totalorder %s15, 0
    %p84 = por %p82, %p83
    %s86 = sadd.s32 %s85, 1
    %p89 = scmp.eq.s32.totalorder %s9, 1
    %p90 = scmp.ne.s32.totalorder %s85, %s87
    %p91 = scmp.eq.s32.totalorder %s9, 0
    %p92 = por %p90, %p91
    %p93 = scmp.ne.s32.totalorder %s85, %s87
    %p94 = scmp.eq.s32.totalorder %s14, 1
    %p95 = por %p93, %p94
    %p96 = scmp.ne.s32.totalorder %s87, %s88
    %p97 = scmp.eq.s32.totalorder %s14, 0
    %p98 = por %p96, %p97
    %p99 = scmp.ne.s32.totalorder %s87, %s88
    %p100 = scmp.eq.s32.totalorder %s15, 1
    %p101 = por %p99, %p100
    %p103 = scmp.ne.s32.totalorder %s88, %s102
    %p104 = scmp.eq.s32.totalorder %s15, 0
    %p105 = por %p103, %p104
    %s106 = ssub.s32 %s16, %s28
    %s107 = ssub.s32 %s17, %s24
    %s108 = sor.u32 %s106, %s107
    %p109 = scmp.eq.s32.totalorder %s108, 0
    %s111 = sadd.s32 %s110, 1
    %s112 = scalar_select %p109, %s110, %s111
    %p115 = pneg %p109
    %p116 = scmp.eq.s32.totalorder %s9, 1
    %p117 = por %p115, %p116
    %p118 = scmp.ne.s32.totalorder %s110, %s113
    %p119 = scmp.eq.s32.totalorder %s9, 0
    %p120 = por %p118, %p119
    %p121 = scmp.ne.s32.totalorder %s110, %s113
    %p122 = scmp.eq.s32.totalorder %s14, 1
    %p123 = por %p121, %p122
    %p124 = scmp.ne.s32.totalorder %s113, %s114
    %p125 = scmp.eq.s32.totalorder %s14, 0
    %p126 = por %p124, %p125
    %p127 = scmp.ne.s32.totalorder %s113, %s114
    %p128 = scmp.eq.s32.totalorder %s15, 1
    %p129 = por %p127, %p128
    %p131 = scmp.ne.s32.totalorder %s114, %s130
    %p132 = scmp.eq.s32.totalorder %s15, 0
    %p133 = por %p131, %p132
    %p134 = scmp.le.s32.totalorder 1, %s9
    %p135 = scmp.lt.s32.totalorder %s9, 3
    %p136 = pnand %p134, %p135
    %p137 = pneg %p136
    // Predicated region
    $region9: #{multi_resolution_stft_loss.2} parent=5 // pred_check
      _
    $region10: #{multi_resolution_stft_loss.2} parent=5 // pred_check_branch
      %139 = sbr.rel (%p136) target = $region12
    $region11: #{multi_resolution_stft_loss.2} parent=5 // pred_region
      %s140 = ssub.s32 %s9, 1
      // Predicated region
      $region13: #{multi_resolution_stft_loss.2} parent=11 // pred_check
        %p141 = pneg %p98
      $region14: #{multi_resolution_stft_loss.2} parent=11 // pred_check_branch
        %143 = sbr.rel (%p141) target = $region16
      $region15: #{multi_resolution_stft_loss.2} parent=11 // pred_region
        _
      $region16: #{multi_resolution_stft_loss.2} parent=11 // pred_fallthru
        _
    $region12: #{multi_resolution_stft_loss.2} parent=5 // pred_fallthru
      _
    %p144 = scmp.lt.s32.totalorder %s9, 2
    // Predicated region
    $region17: #{multi_resolution_stft_loss.2} parent=5 // pred_check
      %p145 = pneg %p144
    $region18: #{multi_resolution_stft_loss.2} parent=5 // pred_check_branch
      %147 = sbr.rel (%p145) target = $region20
    $region19: #{multi_resolution_stft_loss.2} parent=5 // pred_region
      // Predicated region
      $region21: #{multi_resolution_stft_loss.2} parent=19 // pred_check
        %p148 = pneg %p43
      $region22: #{multi_resolution_stft_loss.2} parent=19 // pred_check_branch
        %150 = sbr.rel (%p148) target = $region24
      $region23: #{multi_resolution_stft_loss.2} parent=19 // pred_region
        %s151 = smul.u32 4, %s17
        %p152 = scmp.lt.s32.totalorder %s16, 1
        %s153 = scalar_select %p152, %s16, 1
        %p154 = scmp.lt.s32.totalorder %s151, 3
        %s155 = scalar_select %p154, %s151, 3
        %s156 = smul.addr %s153, 4
        %s157 = sadd.s32 %s155, %s156
        %s158 = smul.addr %s157, 4
        %s159 = scalar_lea.vmem %s0, %s158
        %s160 = smul.u32 4, %s17
      $region24: #{multi_resolution_stft_loss.2} parent=19 // pred_fallthru
        _
      // Predicated region
      $region25: #{multi_resolution_stft_loss.2} parent=19 // pred_check
        %p161 = pneg %p71
      $region26: #{multi_resolution_stft_loss.2} parent=19 // pred_check_branch
        %163 = sbr.rel (%p161) target = $region28
      $region27: #{multi_resolution_stft_loss.2} parent=19 // pred_region
        %s164 = smul.u32 4, %s17
        %p165 = scmp.lt.s32.totalorder %s16, 1
        %s166 = scalar_select %p165, %s16, 1
        %p167 = scmp.lt.s32.totalorder %s164, 3
        %s168 = scalar_select %p167, %s164, 3
        %s169 = smul.addr %s166, 4
        %s170 = sadd.s32 %s168, %s169
        %s171 = smul.addr %s170, 4
        %s172 = scalar_lea.vmem %s1, %s171
        %s173 = smul.u32 4, %s17
      $region28: #{multi_resolution_stft_loss.2} parent=19 // pred_fallthru
        _
    $region20: #{multi_resolution_stft_loss.2} parent=5 // pred_fallthru
      _
    %p174 = scmp.le.s32.totalorder 1, %s9
    %p175 = scmp.lt.s32.totalorder %s9, 3
    %p176 = pnand %p174, %p175
    %p177 = pneg %p176
    // Predicated region
    $region29: #{multi_resolution_stft_loss.2} parent=5 // pred_check
      _
    $region30: #{multi_resolution_stft_loss.2} parent=5 // pred_check_branch
      %179 = sbr.rel (%p176) target = $region32
    $region31: #{multi_resolution_stft_loss.2} parent=5 // pred_region
      %s180 = ssub.s32 %s9, 1
      %s181 = smul.u32 4, %s19
      %p182 = scmp.lt.s32.totalorder %s18, 1
      %s183 = scalar_select %p182, %s18, 1
      %p184 = scmp.lt.s32.totalorder %s181, 3
      %s185 = scalar_select %p184, %s181, 3
      %s186 = smul.addr %s183, 4
      %s187 = sadd.s32 %s185, %s186
      %s188 = smul.addr %s187, 4
      %s189 = scalar_lea.vmem %s0, %s188
      %p190 = pneg %p49
      %p191 = pneg %p46
      %s192 = smul.u32 4, %s19
      %p193 = scmp.lt.s32.totalorder %s18, 1
      %s194 = scalar_select %p193, %s18, 1
      %p195 = scmp.lt.s32.totalorder %s192, 3
      %s196 = scalar_select %p195, %s192, 3
      %s197 = smul.addr %s194, 4
      %s198 = sadd.s32 %s196, %s197
      %s199 = smul.addr %s198, 4
      %s200 = scalar_lea.vmem %s1, %s199
      %p201 = pneg %p77
      %p202 = pneg %p74
      %p203 = pneg %p98
      %p204 = pneg %p95
      %p205 = pneg %p126
      %p206 = pneg %p123
      %p207 = scmp.lt.s32.totalorder %s18, 1
      %s208 = scalar_select %p207, %s18, 1
      %p209 = scmp.lt.s32.totalorder %s19, 0
      %s210 = scalar_select %p209, %s19, 0
      %s211 = sadd.s32 %s210, %s208
      %s212 = scalar_lea.vmem %s3, %s211
      %s213 = smul.u32 4, %s19
      %p214 = scmp.lt.s32.totalorder %s18, 1
      %s215 = scalar_select %p214, %s18, 1
      %p216 = scmp.lt.s32.totalorder %s213, 3
      %s217 = scalar_select %p216, %s213, 3
      %s218 = smul.addr %s215, 4
      %s219 = sadd.s32 %s217, %s218
      %s220 = smul.addr %s219, 4
      %s221 = scalar_lea.vmem %s0, %s220
      %s222 = smul.u32 4, %s19
      %s223 = smul.u32 4, %s19
      %p224 = scmp.lt.s32.totalorder %s18, 1
      %s225 = scalar_select %p224, %s18, 1
      %p226 = scmp.lt.s32.totalorder %s223, 3
      %s227 = scalar_select %p226, %s223, 3
      %s228 = smul.addr %s225, 4
      %s229 = sadd.s32 %s227, %s228
      %s230 = smul.addr %s229, 4
      %s231 = scalar_lea.vmem %s1, %s230
      %s232 = smul.u32 4, %s19
      %p233 = scmp.lt.s32.totalorder %s18, 1
      %s234 = scalar_select %p233, %s18, 1
      %p235 = scmp.lt.s32.totalorder %s19, 0
      %s236 = scalar_select %p235, %s19, 0
      %s237 = sadd.s32 %s236, %s234
      %s238 = scalar_lea.vmem %s3, %s237
      %v240 = vld [vmem:[%s2] sm:$0xff]
      %v241 = vld [vmem:[%s2 + $0x8] sm:$0xff]
      %v242 = vld [vmem:[%s2 + $0x10] sm:$0xff]
      %v243 = vld [vmem:[%s2 + $0x18] sm:$0xff]
      %v244 = vld [vmem:[%s2 + $0x20] sm:$0xff]
      %v245 = vld [vmem:[%s2 + $0x28] sm:$0xff]
      %v246 = vld [vmem:[%s2 + $0x30] sm:$0xff]
      %v247 = vld [vmem:[%s2 + $0x38] sm:$0xff]
      %v248 = vld [vmem:[%s221] sm:$0xf]
      %v249 = vld [vmem:[%s221 + $0x4] sm:$0xf]
      %v250 = vld [vmem:[%s221 + $0x8] sm:$0xf]
      %v251 = vld [vmem:[%s221 + $0xc] sm:$0xf]
      %v256 = vunpack.c.l.b16 %v248
      %v257 = vunpack.c.l.b16 %v249
      %v258 = vunpack.c.l.b16 %v250
      %v259 = vunpack.c.l.b16 %v251
      %v260 = vpack.c.b16 %v257, %v256
      %v261 = vpack.c.b16 %v259, %v258
      %v270 = vunpack.c.l.b16 %v240
      %v271 = vunpack.c.h.b16 %v240
      %v272 = vunpack.c.l.b16 %v241
      %v273 = vunpack.c.h.b16 %v241
      %v274 = vunpack.c.l.b16 %v242
      %v275 = vunpack.c.h.b16 %v242
      %v276 = vunpack.c.l.b16 %v243
      %v277 = vunpack.c.h.b16 %v243
      %v278 = vunpack.c.l.b16 %v244
      %v279 = vunpack.c.h.b16 %v244
      %v280 = vunpack.c.l.b16 %v245
      %v281 = vunpack.c.h.b16 %v245
      %v282 = vunpack.c.l.b16 %v246
      %v283 = vunpack.c.h.b16 %v246
      %v284 = vunpack.c.l.b16 %v247
      %v285 = vunpack.c.h.b16 %v247
      %v286 = vpack.c.b16 %v272, %v270
      %v287 = vpack.c.b16 %v273, %v271
      %v288 = vpack.c.b16 %v276, %v274
      %v289 = vpack.c.b16 %v277, %v275
      %v290 = vpack.c.b16 %v280, %v278
      %v291 = vpack.c.b16 %v281, %v279
      %v292 = vpack.c.b16 %v284, %v282
      %v293 = vpack.c.b16 %v285, %v283
      %vm302 = vcmask 523264
      %v304 = vsel %vm302, %v260, 0
      %v307 = vsel %vm302, %v261, 0
      %309 = vmatpush.bf16.msra.mxu0 0
      %310 = vmatpush.bf16.msra.mxu0 0
      %311 = vmatpush.bf16.msra.mxu0 0
      %312 = vmatpush.bf16.msra.mxu0 0
      %313 = vmatpush.bf16.msra.mxu0 %v292
      %314 = vmatpush.bf16.msra.mxu0 %v290
      %315 = vmatpush.bf16.msra.mxu0 %v288
      %316 = vmatpush.bf16.msra.mxu0 %v286
      %317 = vmatmul.bf16.gmra.mxu0 %v304
      %v318 = vpop.f32.mrf.mxu0
      %v319 = vadd.f32 0.0, %v318
      %v320 = vpop.f32.mrf.mxu0
      %v321 = vadd.f32 0.0, %v320
      %322 = vmatmul.bf16.gmra.mxu0 %v307
      %v323 = vpop.f32.mrf.mxu0
      %v324 = vadd.f32 0.0, %v323
      %v325 = vpop.f32.mrf.mxu0
      %v326 = vadd.f32 0.0, %v325
      %327 = vdwg.mxu0
      %328 = vmatpush.bf16.msra.mxu0 0
      %329 = vmatpush.bf16.msra.mxu0 0
      %330 = vmatpush.bf16.msra.mxu0 0
      %331 = vmatpush.bf16.msra.mxu0 0
      %332 = vmatpush.bf16.msra.mxu0 %v293
      %333 = vmatpush.bf16.msra.mxu0 %v291
      %334 = vmatpush.bf16.msra.mxu0 %v289
      %335 = vmatpush.bf16.msra.mxu0 %v287
      %336 = vmatmul.bf16.gmra.mxu0 %v304
      %v337 = vpop.f32.mrf.mxu0
      %v338 = vadd.f32 0.0, %v337
      %v339 = vpop.f32.mrf.mxu0
      %v340 = vadd.f32 0.0, %v339
      %341 = vmatmul.bf16.gmra.mxu0 %v307
      %v342 = vpop.f32.mrf.mxu0
      %v343 = vadd.f32 0.0, %v342
      %v344 = vpop.f32.mrf.mxu0
      %v345 = vadd.f32 0.0, %v344
      %346 = vdwg.mxu0
      %v347 = vld [vmem:[%s231] sm:$0xf]
      %v348 = vld [vmem:[%s231 + $0x4] sm:$0xf]
      %v349 = vld [vmem:[%s231 + $0x8] sm:$0xf]
      %v350 = vld [vmem:[%s231 + $0xc] sm:$0xf]
      %v355 = vunpack.c.l.b16 %v347
      %v356 = vunpack.c.l.b16 %v348
      %v357 = vunpack.c.l.b16 %v349
      %v358 = vunpack.c.l.b16 %v350
      %v359 = vpack.c.b16 %v356, %v355
      %v360 = vpack.c.b16 %v358, %v357
      %v362 = vsel %vm302, %v359, 0
      %v365 = vsel %vm302, %v360, 0
      %367 = vmatpush.bf16.msra.mxu0 0
      %368 = vmatpush.bf16.msra.mxu0 0
      %369 = vmatpush.bf16.msra.mxu0 0
      %370 = vmatpush.bf16.msra.mxu0 0
      %371 = vmatpush.bf16.msra.mxu0 %v292
      %372 = vmatpush.bf16.msra.mxu0 %v290
      %373 = vmatpush.bf16.msra.mxu0 %v288
      %374 = vmatpush.bf16.msra.mxu0 %v286
      %375 = vmatmul.bf16.gmra.mxu0 %v362
      %v376 = vpop.f32.mrf.mxu0
      %v377 = vadd.f32 0.0, %v376
      %v378 = vpop.f32.mrf.mxu0
      %v379 = vadd.f32 0.0, %v378
      %380 = vmatmul.bf16.gmra.mxu0 %v365
      %v381 = vpop.f32.mrf.mxu0
      %v382 = vadd.f32 0.0, %v381
      %v383 = vpop.f32.mrf.mxu0
      %v384 = vadd.f32 0.0, %v383
      %385 = vdwg.mxu0
      %386 = vmatpush.bf16.msra.mxu0 0
      %387 = vmatpush.bf16.msra.mxu0 0
      %388 = vmatpush.bf16.msra.mxu0 0
      %389 = vmatpush.bf16.msra.mxu0 0
      %390 = vmatpush.bf16.msra.mxu0 %v293
      %391 = vmatpush.bf16.msra.mxu0 %v291
      %392 = vmatpush.bf16.msra.mxu0 %v289
      %393 = vmatpush.bf16.msra.mxu0 %v287
      %394 = vmatmul.bf16.gmra.mxu0 %v362
      %v395 = vpop.f32.mrf.mxu0
      %v396 = vadd.f32 0.0, %v395
      %v397 = vpop.f32.mrf.mxu0
      %v398 = vadd.f32 0.0, %v397
      %399 = vmatmul.bf16.gmra.mxu0 %v365
      %v400 = vpop.f32.mrf.mxu0
      %v401 = vadd.f32 0.0, %v400
      %v402 = vpop.f32.mrf.mxu0
      %v403 = vadd.f32 0.0, %v402
      %404 = vdwg.mxu0
      %v405 = vmul.f32 %v319, %v319
      %v406 = vmul.f32 %v321, %v321
      %v407 = vmul.f32 %v324, %v324
      %v408 = vmul.f32 %v326, %v326
      %v409 = vmul.f32 %v338, %v338
      %v410 = vmul.f32 %v340, %v340
      %v411 = vmul.f32 %v343, %v343
      %v412 = vmul.f32 %v345, %v345
      %v413 = vadd.f32 %v405, %v409
      %v414 = vadd.f32 %v406, %v410
      %v415 = vadd.f32 %v407, %v411
      %v416 = vadd.f32 %v408, %v412
      %v417 = vmul.f32 %v377, %v377
      %v418 = vmul.f32 %v379, %v379
      %v419 = vmul.f32 %v382, %v382
      %v420 = vmul.f32 %v384, %v384
      %v421 = vmul.f32 %v396, %v396
      %v422 = vmul.f32 %v398, %v398
      %v423 = vmul.f32 %v401, %v401
      %v424 = vmul.f32 %v403, %v403
      %v425 = vadd.f32 %v417, %v421
      %v426 = vadd.f32 %v418, %v422
      %v427 = vadd.f32 %v419, %v423
      %v428 = vadd.f32 %v420, %v424
      %v429 = vlaneseq
      %v430 = vshrl.u32 %v429, 7
      %v431 = vadd.s32 %v430, 8
      %v432 = vadd.s32 %v430, 16
      %v433 = vadd.s32 %v430, 24
      %s434 = smul.u32 %s19, 32
      %v435 = vstv %s434
      %v436 = vadd.s32 %v430, %v435
      %v437 = vadd.s32 %v431, %v435
      %v438 = vadd.s32 %v432, %v435
      %v439 = vadd.s32 %v433, %v435
      %v440 = vlaneseq
      %v441 = vand.u32 %v440, 127
      %vm442 = vcmp.lt.s32.totalorder %v436, 17
      %vm443 = vcmp.lt.s32.totalorder %v437, 17
      %vm444 = vcmp.lt.s32.totalorder %v438, 17
      %vm445 = vcmp.lt.s32.totalorder %v439, 17
      %vm446 = vcmp.lt.s32.totalorder %v441, 33
      %vm447 = vmand %vm442, %vm446
      %vm448 = vmand %vm443, %vm446
      %vm449 = vmand %vm444, %vm446
      %vm450 = vmand %vm445, %vm446
      %v451 = vrsqrt.pop %v413
      %v452 = vmul.f32 %v451, %v413
      %v453 = vmul.f32 %v452, %v451
      %v454 = vmul.f32 0.5, %v453
      %v455 = vsub.f32 1.5, %v454
      %v456 = vmul.f32 %v451, %v455
      %v457 = vmul.f32 %v413, %v456
      %vm458 = vcmp.eq.f32.partialorder %v413, inf
      %v459 = vsel %vm458, %v413, %v457
      %vm460 = vcmp.eq.f32.partialorder %v413, 0.0
      %v461 = vand.u32 %v413, 2147483648
      %v462 = vsel %vm460, %v461, %v459
      %v463 = vrsqrt.pop %v414
      %v464 = vmul.f32 %v463, %v414
      %v465 = vmul.f32 %v464, %v463
      %v466 = vmul.f32 0.5, %v465
      %v467 = vsub.f32 1.5, %v466
      %v468 = vmul.f32 %v463, %v467
      %v469 = vmul.f32 %v414, %v468
      %vm470 = vcmp.eq.f32.partialorder %v414, inf
      %v471 = vsel %vm470, %v414, %v469
      %vm472 = vcmp.eq.f32.partialorder %v414, 0.0
      %v473 = vand.u32 %v414, 2147483648
      %v474 = vsel %vm472, %v473, %v471
      %v475 = vrsqrt.pop %v415
      %v476 = vmul.f32 %v475, %v415
      %v477 = vmul.f32 %v476, %v475
      %v478 = vmul.f32 0.5, %v477
      %v479 = vsub.f32 1.5, %v478
      %v480 = vmul.f32 %v475, %v479
      %v481 = vmul.f32 %v415, %v480
      %vm482 = vcmp.eq.f32.partialorder %v415, inf
      %v483 = vsel %vm482, %v415, %v481
      %vm484 = vcmp.eq.f32.partialorder %v415, 0.0
      %v485 = vand.u32 %v415, 2147483648
      %v486 = vsel %vm484, %v485, %v483
      %v487 = vrsqrt.pop %v416
      %v488 = vmul.f32 %v487, %v416
      %v489 = vmul.f32 %v488, %v487
      %v490 = vmul.f32 0.5, %v489
      %v491 = vsub.f32 1.5, %v490
      %v492 = vmul.f32 %v487, %v491
      %v493 = vmul.f32 %v416, %v492
      %vm494 = vcmp.eq.f32.partialorder %v416, inf
      %v495 = vsel %vm494, %v416, %v493
      %vm496 = vcmp.eq.f32.partialorder %v416, 0.0
      %v497 = vand.u32 %v416, 2147483648
      %v498 = vsel %vm496, %v497, %v495
      %v499 = vrsqrt.pop %v425
      %v500 = vmul.f32 %v499, %v425
      %v501 = vmul.f32 %v500, %v499
      %v502 = vmul.f32 0.5, %v501
      %v503 = vsub.f32 1.5, %v502
      %v504 = vmul.f32 %v499, %v503
      %v505 = vmul.f32 %v425, %v504
      %vm506 = vcmp.eq.f32.partialorder %v425, inf
      %v507 = vsel %vm506, %v425, %v505
      %vm508 = vcmp.eq.f32.partialorder %v425, 0.0
      %v509 = vand.u32 %v425, 2147483648
      %v510 = vsel %vm508, %v509, %v507
      %v511 = vrsqrt.pop %v426
      %v512 = vmul.f32 %v511, %v426
      %v513 = vmul.f32 %v512, %v511
      %v514 = vmul.f32 0.5, %v513
      %v515 = vsub.f32 1.5, %v514
      %v516 = vmul.f32 %v511, %v515
      %v517 = vmul.f32 %v426, %v516
      %vm518 = vcmp.eq.f32.partialorder %v426, inf
      %v519 = vsel %vm518, %v426, %v517
      %vm520 = vcmp.eq.f32.partialorder %v426, 0.0
      %v521 = vand.u32 %v426, 2147483648
      %v522 = vsel %vm520, %v521, %v519
      %v523 = vrsqrt.pop %v427
      %v524 = vmul.f32 %v523, %v427
      %v525 = vmul.f32 %v524, %v523
      %v526 = vmul.f32 0.5, %v525
      %v527 = vsub.f32 1.5, %v526
      %v528 = vmul.f32 %v523, %v527
      %v529 = vmul.f32 %v427, %v528
      %vm530 = vcmp.eq.f32.partialorder %v427, inf
      %v531 = vsel %vm530, %v427, %v529
      %vm532 = vcmp.eq.f32.partialorder %v427, 0.0
      %v533 = vand.u32 %v427, 2147483648
      %v534 = vsel %vm532, %v533, %v531
      %v535 = vrsqrt.pop %v428
      %v536 = vmul.f32 %v535, %v428
      %v537 = vmul.f32 %v536, %v535
      %v538 = vmul.f32 0.5, %v537
      %v539 = vsub.f32 1.5, %v538
      %v540 = vmul.f32 %v535, %v539
      %v541 = vmul.f32 %v428, %v540
      %vm542 = vcmp.eq.f32.partialorder %v428, inf
      %v543 = vsel %vm542, %v428, %v541
      %vm544 = vcmp.eq.f32.partialorder %v428, 0.0
      %v545 = vand.u32 %v428, 2147483648
      %v546 = vsel %vm544, %v545, %v543
      %v547 = vsub.f32 %v510, %v462
      %v548 = vsub.f32 %v522, %v474
      %v549 = vsub.f32 %v534, %v486
      %v550 = vsub.f32 %v546, %v498
      %v551 = vsel %vm447, %v413, 1.0
      %v552 = vsel %vm448, %v414, 1.0
      %v553 = vsel %vm449, %v415, 1.0
      %v554 = vsel %vm450, %v416, 1.0
      %v555 = vsel %vm447, %v425, 1.0
      %v556 = vsel %vm448, %v426, 1.0
      %v557 = vsel %vm449, %v427, 1.0
      %v558 = vsel %vm450, %v428, 1.0
      %v559 = vrcp.pop %v551
      %v560 = vmul.f32 %v551, %v559
      %v561 = vsub.f32 1.0, %v560
      %v562 = vmul.f32 %v559, %v561
      %v563 = vadd.f32 %v559, %v562
      %vm564 = vweird.f32 %v551
      %vm565 = vweird.f32 %v559
      %vm566 = vmor %vm564, %vm565
      %v567 = vsel %vm566, %v559, %v563
      %v568 = vand.u32 2147483647, %v551
      %vm569 = vcmp.eq.f32.partialorder %v568, 8.507059e+37
      %v570 = vand.u32 %v551, 2147483648
      %v571 = vor.u32 1.1754944e-38, %v570
      %v572 = vsel %vm569, %v571, %v567
      %v573 = vmul.f32 %v555, %v572
      %v574 = vrcp.pop %v552
      %v575 = vmul.f32 %v552, %v574
      %v576 = vsub.f32 1.0, %v575
      %v577 = vmul.f32 %v574, %v576
      %v578 = vadd.f32 %v574, %v577
      %vm579 = vweird.f32 %v552
      %vm580 = vweird.f32 %v574
      %vm581 = vmor %vm579, %vm580
      %v582 = vsel %vm581, %v574, %v578
      %v583 = vand.u32 2147483647, %v552
      %vm584 = vcmp.eq.f32.partialorder %v583, 8.507059e+37
      %v585 = vand.u32 %v552, 2147483648
      %v586 = vor.u32 1.1754944e-38, %v585
      %v587 = vsel %vm584, %v586, %v582
      %v588 = vmul.f32 %v556, %v587
      %v589 = vrcp.pop %v553
      %v590 = vmul.f32 %v553, %v589
      %v591 = vsub.f32 1.0, %v590
      %v592 = vmul.f32 %v589, %v591
      %v593 = vadd.f32 %v589, %v592
      %vm594 = vweird.f32 %v553
      %vm595 = vweird.f32 %v589
      %vm596 = vmor %vm594, %vm595
      %v597 = vsel %vm596, %v589, %v593
      %v598 = vand.u32 2147483647, %v553
      %vm599 = vcmp.eq.f32.partialorder %v598, 8.507059e+37
      %v600 = vand.u32 %v553, 2147483648
      %v601 = vor.u32 1.1754944e-38, %v600
      %v602 = vsel %vm599, %v601, %v597
      %v603 = vmul.f32 %v557, %v602
      %v604 = vrcp.pop %v554
      %v605 = vmul.f32 %v554, %v604
      %v606 = vsub.f32 1.0, %v605
      %v607 = vmul.f32 %v604, %v606
      %v608 = vadd.f32 %v604, %v607
      %vm609 = vweird.f32 %v554
      %vm610 = vweird.f32 %v604
      %vm611 = vmor %vm609, %vm610
      %v612 = vsel %vm611, %v604, %v608
      %v613 = vand.u32 2147483647, %v554
      %vm614 = vcmp.eq.f32.partialorder %v613, 8.507059e+37
      %v615 = vand.u32 %v554, 2147483648
      %v616 = vor.u32 1.1754944e-38, %v615
      %v617 = vsel %vm614, %v616, %v612
      %v618 = vmul.f32 %v558, %v617
      %v619 = vlog2.pop %v573
      %v620 = vmul.f32 %v619, 0.6931472
      %v621 = vlog2.pop %v588
      %v622 = vmul.f32 %v621, 0.6931472
      %v623 = vlog2.pop %v603
      %v624 = vmul.f32 %v623, 0.6931472
      %v625 = vlog2.pop %v618
      %v626 = vmul.f32 %v625, 0.6931472
      %v627 = vand.u32 2147483647, %v620
      %v628 = vand.u32 2147483647, %v622
      %v629 = vand.u32 2147483647, %v624
      %v630 = vand.u32 2147483647, %v626
      %v631 = vmul.f32 %v627, 0.5
      %v632 = vmul.f32 %v628, 0.5
      %v633 = vmul.f32 %v629, 0.5
      %v634 = vmul.f32 %v630, 0.5
      %v635 = vmul.f32 %v547, %v547
      %v636 = vmul.f32 %v548, %v548
      %v637 = vmul.f32 %v549, %v549
      %v638 = vmul.f32 %v550, %v550
      %v639 = vsel %vm447, %v635, 0.0
      %v640 = vsel %vm448, %v636, 0.0
      %v641 = vsel %vm449, %v637, 0.0
      %v642 = vsel %vm450, %v638, 0.0
      %v643 = vadd.f32 %v639, %v640
      %v644 = vadd.f32 %v643, %v641
      %v645 = vadd.f32 %v644, %v642
      %646 = vadd.xlane.f32.xlu0 %v645
      %v647 = vpop.xlane.xlu0 %646
      %v648 = vrot.slane %v647, 4
      %v649 = vadd.f32 %v647, %v648
      %v650 = vrot.slane %v649, 2
      %v651 = vadd.f32 %v649, %v650
      %v652 = vrot.slane %v651, 1
      %v653 = vadd.f32 %v651, %v652
      %s654 = vtos %v653
      %v655 = vsel %vm447, %v425, 0.0
      %v656 = vsel %vm448, %v426, 0.0
      %v657 = vsel %vm449, %v427, 0.0
      %v658 = vsel %vm450, %v428, 0.0
      %v659 = vadd.f32 %v655, %v656
      %v660 = vadd.f32 %v659, %v657
      %v661 = vadd.f32 %v660, %v658
      %662 = vadd.xlane.f32.xlu0 %v661
      %v663 = vpop.xlane.xlu0 %662
      %v664 = vrot.slane %v663, 4
      %v665 = vadd.f32 %v663, %v664
      %v666 = vrot.slane %v665, 2
      %v667 = vadd.f32 %v665, %v666
      %v668 = vrot.slane %v667, 1
      %v669 = vadd.f32 %v667, %v668
      %s670 = vtos %v669
      %v671 = vadd.f32 %v631, %v632
      %v672 = vadd.f32 %v671, %v633
      %v673 = vadd.f32 %v672, %v634
      %674 = vadd.xlane.f32.xlu0 %v673
      %v675 = vpop.xlane.xlu0 %674
      %v676 = vrot.slane %v675, 4
      %v677 = vadd.f32 %v675, %v676
      %v678 = vrot.slane %v677, 2
      %v679 = vadd.f32 %v677, %v678
      %v680 = vrot.slane %v679, 1
      %v681 = vadd.f32 %v679, %v680
      %s682 = vtos %v681
      %vm683 = vcmp.eq.s32.totalorder %v441, 0
      %v684 = vsel %vm683, 1, 0
      %v685 = vcvt.s32.f32 %v684
      %v686 = vstv %s654
      %v687 = vmul.f32 %v686, %v685
      %vm688 = vcmp.eq.s32.totalorder %v441, 1
      %v689 = vsel %vm688, 1, 0
      %v690 = vcvt.s32.f32 %v689
      %v691 = vstv %s670
      %v692 = vmul.f32 %v691, %v690
      %v693 = vadd.f32 %v687, %v692
      %vm694 = vcmp.eq.s32.totalorder %v441, 2
      %v695 = vsel %vm694, 1, 0
      %v696 = vcvt.s32.f32 %v695
      %v697 = vstv %s682
      %v698 = vmul.f32 %v697, %v696
      %v699 = vadd.f32 %v693, %v698
      %700 = vst [vmem:[%s238] sm:$0x1] %v699
      %p701 = scmp.lt.s32.totalorder %s18, 1
      %s702 = scalar_select %p701, %s18, 1
      %p703 = scmp.lt.s32.totalorder %s19, 0
      %s704 = scalar_select %p703, %s19, 0
      %s705 = sadd.s32 %s704, %s702
      %s706 = scalar_lea.vmem %s3, %s705
      // Predicated region
      $region33: #{multi_resolution_stft_loss.2} parent=31 // pred_check
        %p707 = pneg %p123
      $region34: #{multi_resolution_stft_loss.2} parent=31 // pred_check_branch
        %709 = sbr.rel (%p707) target = $region36
      $region35: #{multi_resolution_stft_loss.2} parent=31 // pred_region
        _
      $region36: #{multi_resolution_stft_loss.2} parent=31 // pred_fallthru
        _
    $region32: #{multi_resolution_stft_loss.2} parent=5 // pred_fallthru
      _
    %p710 = scmp.le.s32.totalorder 2, %s9
    // Predicated region
    $region37: #{multi_resolution_stft_loss.2} parent=5 // pred_check
      %p711 = pneg %p710
    $region38: #{multi_resolution_stft_loss.2} parent=5 // pred_check_branch
      %713 = sbr.rel (%p711) target = $region40
    $region39: #{multi_resolution_stft_loss.2} parent=5 // pred_region
      %s714 = ssub.s32 %s9, 2
      // Predicated region
      $region41: #{multi_resolution_stft_loss.2} parent=39 // pred_check
        %p715 = pneg %p129
      $region42: #{multi_resolution_stft_loss.2} parent=39 // pred_check_branch
        %717 = sbr.rel (%p715) target = $region44
      $region43: #{multi_resolution_stft_loss.2} parent=39 // pred_region
        %p718 = scmp.lt.s32.totalorder %s20, 1
        %s719 = scalar_select %p718, %s20, 1
        %p720 = scmp.lt.s32.totalorder %s21, 0
        %s721 = scalar_select %p720, %s21, 0
        %s722 = sadd.s32 %s721, %s719
        %s723 = scalar_lea.vmem %s3, %s722
      $region44: #{multi_resolution_stft_loss.2} parent=39 // pred_fallthru
        _
    $region40: #{multi_resolution_stft_loss.2} parent=5 // pred_fallthru
      _
  $region6: #{multi_resolution_stft_loss.2} parent=0 // loop_footer
    %s13 = sadd.s32 1, %s9
  $region7: #{multi_resolution_stft_loss.2} parent=0 // loop_footer_branch
    %8 = sbr.rel target = $region3
  $region8: #{multi_resolution_stft_loss.2} parent=0 // loop_exit
    _

</llo_original>
